<compile_context>
chip_gen: v6e
topology: v6e:2x2x1
jax: 0.10.0
libtpu: 0.0.40
codegen_flags: <defaults>
</compile_context>

<pallas_src>
import functools
import math

import jax
import jax.numpy as jnp
from jax import lax
from jax.experimental import pallas as pl
from jax.experimental.pallas import tpu as pltpu


# ----------------------------------------------------------------------------
# Single fused kernel: (scale + PE) -> num_layers x [attn + LN1 + FFN + LN2]
# ----------------------------------------------------------------------------
def fused_encoder_kernel(
    x_ref,      # (B*S, D)  gathered embedding rows (unscaled)
    pe_ref,     # (B*S, D)  positional encodings, pre-tiled over batch
    wq_ref,     # (L, D, D) q_linear weights (also used for k and v)
    wo_ref,     # (L, D, D) attention output projection
    w1_ref,     # (L, D, F) FFN linear1 weights
    w2_ref,     # (L, F, D) FFN linear2 weights
    vd_ref,     # (L, 7, D) stacked [bq, bo, b2, g1, beta1, g2, beta2]
    b1_ref,     # (L, 1, F) FFN linear1 bias
    o_ref,      # (B*S, D)
    *, num_layers, batch, seq, d_model,
):
    inv_sqrt_dk = jnp.float32(1.0 / math.sqrt(d_model))   # num_heads == 1

    # Embedding double scaling (*d_model) + positional encoding, fused here.
    # Dropout = identity (eval semantics).
    x = x_ref[...] * jnp.float32(d_model) + pe_ref[...]           # (B*S, D)

    for li in range(num_layers):       # static unroll (small num_layers)
        wq = wq_ref[li]
        wo = wo_ref[li]
        w1 = w1_ref[li]
        w2 = w2_ref[li]
        vd = vd_ref[li]                                           # (7, D)
        bq, bo, b2 = vd[0:1], vd[1:2], vd[2:3]
        g1, beta1 = vd[3:4], vd[4:5]
        g2, beta2 = vd[5:6], vd[6:7]
        b1 = b1_ref[li]                                           # (1, F)

        # ---- self-attention (q == k == v via q_linear, as in the source) ----
        q = jnp.dot(x, wq, preferred_element_type=jnp.float32) + bq   # (B*S, D)
        q3 = q.reshape(batch, seq, d_model)                           # (B, S, D)
        # q @ q^T per batch, contraction on the feature dim (no transpose);
        # 1/sqrt(d_k) applied to the small (S, S) scores.
        scores = lax.dot_general(                                     # (B, S, S)
            q3, q3,
            dimension_numbers=(((2,), (2,)), ((0,), (0,))),
            preferred_element_type=jnp.float32) * inv_sqrt_dk
        scores = scores - jnp.max(scores, axis=-1, keepdims=True)
        e = jnp.exp(scores)
        attn = e * pl.reciprocal(jnp.sum(e, axis=-1, keepdims=True),
                                 approx=True)                         # EUP slot
        ctx = lax.dot_general(                                        # (B, S, D)
            attn, q3,
            dimension_numbers=(((2,), (1,)), ((0,), (0,))),
            preferred_element_type=jnp.float32)
        z = jnp.dot(ctx.reshape(batch * seq, d_model), wo,
                    preferred_element_type=jnp.float32) + bo

        # ---- residual + LayerNorm1 ----
        x = x + z
        mu = jnp.mean(x, axis=-1, keepdims=True)
        var = jnp.mean((x - mu) ** 2, axis=-1, keepdims=True)
        x = (x - mu) * lax.rsqrt(var + 1e-5) * g1 + beta1

        # ---- feed-forward ----
        h = jnp.dot(x, w1, preferred_element_type=jnp.float32) + b1
        h = jnp.maximum(h, 0.0)
        y = jnp.dot(h, w2, preferred_element_type=jnp.float32) + b2

        # ---- residual + LayerNorm2 ----
        x = x + y
        mu = jnp.mean(x, axis=-1, keepdims=True)
        var = jnp.mean((x - mu) ** 2, axis=-1, keepdims=True)
        x = (x - mu) * lax.rsqrt(var + 1e-5) * g2 + beta2

    o_ref[...] = x


def _full_spec(shape):
    # Full-extent block (legal regardless of (8,128) alignment), single grid step.
    return pl.BlockSpec(shape, lambda *_: (0,) * len(shape))


def fused_encoder_call(x_emb, pe, stacked, *, num_layers, batch, seq, d_model):
    bs = batch * seq
    kernel = functools.partial(
        fused_encoder_kernel,
        num_layers=num_layers, batch=batch, seq=seq, d_model=d_model)
    in_arrays = (x_emb, pe, stacked["wq"], stacked["wo"], stacked["w1"],
                 stacked["w2"], stacked["vecd"], stacked["b1"])
    return pl.pallas_call(
        kernel,
        out_shape=jax.ShapeDtypeStruct((bs, d_model), jnp.float32),
        grid=(1,),
        in_specs=[_full_spec(a.shape) for a in in_arrays],
        out_specs=_full_spec((bs, d_model)),
        compiler_params=pltpu.CompilerParams(
            dimension_semantics=("arbitrary",)),
    )(*in_arrays)


# ----------------------------------------------------------------------------
# Glue: embedding lookup (XLA gather in the same jit), parameter construction.
# ----------------------------------------------------------------------------
def positional_encoding(max_len, d_model):
    position = jnp.arange(max_len, dtype=jnp.float32)[:, None]          # (L, 1)
    div_term = jnp.exp(jnp.arange(0, d_model, 2, dtype=jnp.float32)
                       * (-math.log(10000.0) / d_model))                # (D/2,)
    pe = jnp.zeros((max_len, d_model), dtype=jnp.float32)
    pe = pe.at[:, 0::2].set(jnp.sin(position * div_term))
    pe = pe.at[:, 1::2].set(jnp.cos(position * div_term))
    return pe                                                           # (L, D)


def make_params(key, num_layers, d_model, d_ff, vocab_size):
    keys = jax.random.split(key, 1 + num_layers)
    emb = 0.02 * jax.random.normal(keys[0], (vocab_size, d_model), jnp.float32)
    layers = []
    for li in range(num_layers):
        ks = jax.random.split(keys[1 + li], 8)
        s = 0.05
        layers.append(dict(
            wq=s * jax.random.normal(ks[0], (d_model, d_model), jnp.float32),
            bq=s * jax.random.normal(ks[1], (1, d_model), jnp.float32),
            wo=s * jax.random.normal(ks[2], (d_model, d_model), jnp.float32),
            bo=s * jax.random.normal(ks[3], (1, d_model), jnp.float32),
            w1=s * jax.random.normal(ks[4], (d_model, d_ff), jnp.float32),
            b1=s * jax.random.normal(ks[5], (1, d_ff), jnp.float32),
            w2=s * jax.random.normal(ks[6], (d_ff, d_model), jnp.float32),
            b2=s * jax.random.normal(ks[7], (1, d_model), jnp.float32),
            g1=jnp.ones((1, d_model), jnp.float32),
            beta1=jnp.zeros((1, d_model), jnp.float32),
            g2=jnp.ones((1, d_model), jnp.float32),
            beta2=jnp.zeros((1, d_model), jnp.float32),
        ))
    return emb, layers


def stack_params(layers):
    """Stack per-layer weights across layers; concat small vectors into one slab."""
    return dict(
        wq=jnp.stack([p["wq"] for p in layers]),          # (L, D, D)
        wo=jnp.stack([p["wo"] for p in layers]),          # (L, D, D)
        w1=jnp.stack([p["w1"] for p in layers]),          # (L, D, F)
        w2=jnp.stack([p["w2"] for p in layers]),          # (L, F, D)
        vecd=jnp.stack([jnp.concatenate(
            [p["bq"], p["bo"], p["b2"], p["g1"], p["beta1"], p["g2"], p["beta2"]],
            axis=0) for p in layers]),                    # (L, 7, D)
        b1=jnp.stack([p["b1"] for p in layers]),          # (L, 1, F)
    )


@jax.jit
def encoder_forward(tokens, emb, stacked, pe_table):
    B, S = tokens.shape
    L, D, _ = stacked["wq"].shape
    x_emb = emb[tokens].reshape(B * S, D)                              # XLA gather
    pe = jnp.broadcast_to(pe_table[:S][None], (B, S, D)).reshape(B * S, D)
    out = fused_encoder_call(x_emb, pe, stacked,
                             num_layers=L, batch=B, seq=S, d_model=D)
    return out.reshape(B, S, D)


# Pure-JAX reference of the same semantics, for correctness checking.
def encoder_forward_ref(tokens, emb, layers, d_model, max_len):
    x = emb[tokens] * jnp.float32(d_model)
    pe = positional_encoding(max_len, d_model)
    x = x + pe[None, : x.shape[1], :]
    for p in layers:
        q = x @ p["wq"] + p["bq"]
        scores = jnp.einsum("bqd,bkd->bqk", q, q) / jnp.sqrt(jnp.float32(d_model))
        attn = jax.nn.softmax(scores, axis=-1)
        ctx = jnp.einsum("bqk,bkd->bqd", attn, q)
        z = ctx @ p["wo"] + p["bo"]
        x = x + z
        mu = x.mean(-1, keepdims=True)
        var = ((x - mu) ** 2).mean(-1, keepdims=True)
        x = (x - mu) / jnp.sqrt(var + 1e-5) * p["g1"] + p["beta1"]
        h = jnp.maximum(x @ p["w1"] + p["b1"], 0.0)
        y = h @ p["w2"] + p["b2"]
        x = x + y
        mu = x.mean(-1, keepdims=True)
        var = ((x - mu) ** 2).mean(-1, keepdims=True)
        x = (x - mu) / jnp.sqrt(var + 1e-5) * p["g2"] + p["beta2"]
    return x


if __name__ == "__main__":
    num_layers = 2
    d_model = 32
    num_heads = 1
    d_ff = 64
    vocab_size = 50
    max_len = 128
    B, S = 2, 8

    key = jax.random.PRNGKey(0)
    kp, kt = jax.random.split(key)
    emb, layers = make_params(kp, num_layers, d_model, d_ff, vocab_size)
    stacked = stack_params(layers)
    pe_table = positional_encoding(max_len, d_model)   # hoisted: built once
    tokens = jax.random.randint(kt, (B, S), 0, vocab_size)

    out = encoder_forward(tokens, emb, stacked, pe_table)
    out = jax.block_until_ready(out)

    ref = encoder_forward_ref(tokens, emb, layers, d_model, max_len)
    assert out.shape == (B, S, d_model)
    # Tolerance relaxed slightly vs 1e-4 to cover the EUP approx reciprocal in
    # the softmax denominator.
    assert jnp.allclose(out, ref, atol=2e-3, rtol=2e-3), "mismatch vs reference"

    print("KERNEL_OK")
</pallas_src>

<mosaic_0001>
module attributes {stable_mosaic.version = 11 : i64} {
  func.func @fused_encoder_kernel(%arg0: i32, %arg1: memref<16x32xf32, #tpu.memory_space<vmem>>, %arg2: memref<16x32xf32, #tpu.memory_space<vmem>>, %arg3: memref<2x32x32xf32, #tpu.memory_space<vmem>>, %arg4: memref<2x32x32xf32, #tpu.memory_space<vmem>>, %arg5: memref<2x32x64xf32, #tpu.memory_space<vmem>>, %arg6: memref<2x64x32xf32, #tpu.memory_space<vmem>>, %arg7: memref<2x7x32xf32, #tpu.memory_space<vmem>>, %arg8: memref<2x1x64xf32, #tpu.memory_space<vmem>>, %arg9: memref<16x32xf32, #tpu.memory_space<vmem>>) attributes {dimension_semantics = [#tpu.dimension_semantics<arbitrary>], iteration_bounds = array<i64: 1>, scalar_prefetch = 0 : i64, scratch_operands = 0 : i64, tpu.core_type = #tpu.core_type<tc>, window_params = [{pipeline_mode = #tpu.pipeline_mode<synchronous>, transform_indices = @transform_0, window_bounds = array<i64: 16, 32>}, {pipeline_mode = #tpu.pipeline_mode<synchronous>, transform_indices = @transform_1, window_bounds = array<i64: 16, 32>}, {pipeline_mode = #tpu.pipeline_mode<synchronous>, transform_indices = @transform_2, window_bounds = array<i64: 2, 32, 32>}, {pipeline_mode = #tpu.pipeline_mode<synchronous>, transform_indices = @transform_3, window_bounds = array<i64: 2, 32, 32>}, {pipeline_mode = #tpu.pipeline_mode<synchronous>, transform_indices = @transform_4, window_bounds = array<i64: 2, 32, 64>}, {pipeline_mode = #tpu.pipeline_mode<synchronous>, transform_indices = @transform_5, window_bounds = array<i64: 2, 64, 32>}, {pipeline_mode = #tpu.pipeline_mode<synchronous>, transform_indices = @transform_6, window_bounds = array<i64: 2, 7, 32>}, {pipeline_mode = #tpu.pipeline_mode<synchronous>, transform_indices = @transform_7, window_bounds = array<i64: 2, 1, 64>}, {pipeline_mode = #tpu.pipeline_mode<synchronous>, transform_indices = @transform_8, window_bounds = array<i64: 16, 32>}]} {
    %c0 = arith.constant 0 : index
    %c0_0 = arith.constant 0 : index
    %0 = vector.load %arg1[%c0, %c0_0] : memref<16x32xf32, #tpu.memory_space<vmem>>, vector<16x32xf32>
    %cst = arith.constant 3.200000e+01 : f32
    %1 = vector.broadcast %cst : f32 to vector<16x32xf32>
    %2 = arith.mulf %0, %1 : vector<16x32xf32>
    %c0_1 = arith.constant 0 : index
    %c0_2 = arith.constant 0 : index
    %3 = vector.load %arg2[%c0_1, %c0_2] : memref<16x32xf32, #tpu.memory_space<vmem>>, vector<16x32xf32>
    %4 = arith.addf %2, %3 : vector<16x32xf32>
    %c0_3 = arith.constant 0 : index
    %c0_4 = arith.constant 0 : index
    %c0_5 = arith.constant 0 : index
    %5 = vector.load %arg3[%c0_3, %c0_4, %c0_5] : memref<2x32x32xf32, #tpu.memory_space<vmem>>, vector<1x32x32xf32>
    %6 = vector.shape_cast %5 : vector<1x32x32xf32> to vector<32x32xf32>
    %c0_6 = arith.constant 0 : index
    %c0_7 = arith.constant 0 : index
    %c0_8 = arith.constant 0 : index
    %7 = vector.load %arg4[%c0_6, %c0_7, %c0_8] : memref<2x32x32xf32, #tpu.memory_space<vmem>>, vector<1x32x32xf32>
    %8 = vector.shape_cast %7 : vector<1x32x32xf32> to vector<32x32xf32>
    %c0_9 = arith.constant 0 : index
    %c0_10 = arith.constant 0 : index
    %c0_11 = arith.constant 0 : index
    %9 = vector.load %arg5[%c0_9, %c0_10, %c0_11] : memref<2x32x64xf32, #tpu.memory_space<vmem>>, vector<1x32x64xf32>
    %10 = vector.shape_cast %9 : vector<1x32x64xf32> to vector<32x64xf32>
    %c0_12 = arith.constant 0 : index
    %c0_13 = arith.constant 0 : index
    %c0_14 = arith.constant 0 : index
    %11 = vector.load %arg6[%c0_12, %c0_13, %c0_14] : memref<2x64x32xf32, #tpu.memory_space<vmem>>, vector<1x64x32xf32>
    %12 = vector.shape_cast %11 : vector<1x64x32xf32> to vector<64x32xf32>
    %c0_15 = arith.constant 0 : index
    %c0_16 = arith.constant 0 : index
    %c0_17 = arith.constant 0 : index
    %13 = vector.load %arg7[%c0_15, %c0_16, %c0_17] : memref<2x7x32xf32, #tpu.memory_space<vmem>>, vector<1x7x32xf32>
    %14 = vector.shape_cast %13 : vector<1x7x32xf32> to vector<7x32xf32>
    %15 = vector.extract_strided_slice %14 {offsets = [0, 0], sizes = [1, 32], strides = [1, 1]} : vector<7x32xf32> to vector<1x32xf32>
    %16 = vector.extract_strided_slice %14 {offsets = [1, 0], sizes = [1, 32], strides = [1, 1]} : vector<7x32xf32> to vector<1x32xf32>
    %17 = vector.extract_strided_slice %14 {offsets = [2, 0], sizes = [1, 32], strides = [1, 1]} : vector<7x32xf32> to vector<1x32xf32>
    %18 = vector.extract_strided_slice %14 {offsets = [3, 0], sizes = [1, 32], strides = [1, 1]} : vector<7x32xf32> to vector<1x32xf32>
    %19 = vector.extract_strided_slice %14 {offsets = [4, 0], sizes = [1, 32], strides = [1, 1]} : vector<7x32xf32> to vector<1x32xf32>
    %20 = vector.extract_strided_slice %14 {offsets = [5, 0], sizes = [1, 32], strides = [1, 1]} : vector<7x32xf32> to vector<1x32xf32>
    %21 = vector.extract_strided_slice %14 {offsets = [6, 0], sizes = [1, 32], strides = [1, 1]} : vector<7x32xf32> to vector<1x32xf32>
    %c0_18 = arith.constant 0 : index
    %c0_19 = arith.constant 0 : index
    %c0_20 = arith.constant 0 : index
    %22 = vector.load %arg8[%c0_18, %c0_19, %c0_20] : memref<2x1x64xf32, #tpu.memory_space<vmem>>, vector<1x1x64xf32>
    %23 = vector.shape_cast %22 : vector<1x1x64xf32> to vector<1x64xf32>
    %cst_21 = arith.constant dense<0.000000e+00> : vector<16x32xf32>
    %24 = tpu.matmul %4, %6, %cst_21 {dimension_numbers = #tpu.dot_dimension_numbers<[1], [0], [0], [1], [0, 0, 1, 1], [], []>} : vector<16x32xf32>, vector<32x32xf32>, vector<16x32xf32> -> vector<16x32xf32>
    %25 = vector.broadcast %15 : vector<1x32xf32> to vector<16x32xf32>
    %26 = arith.addf %24, %25 : vector<16x32xf32>
    %27 = vector.shape_cast %26 : vector<16x32xf32> to vector<2x8x32xf32>
    %cst_22 = arith.constant dense<0.000000e+00> : vector<2x8x8xf32>
    %28 = tpu.matmul %27, %27, %cst_22 {dimension_numbers = #tpu.dot_dimension_numbers<[2], [2], [1], [1], [0, 0, 0, 1, 1, 1], [0], [0]>} : vector<2x8x32xf32>, vector<2x8x32xf32>, vector<2x8x8xf32> -> vector<2x8x8xf32>
    %cst_23 = arith.constant 0.176776692 : f32
    %29 = vector.broadcast %cst_23 : f32 to vector<2x8x8xf32>
    %30 = arith.mulf %28, %29 : vector<2x8x8xf32>
    %cst_24 = arith.constant dense<0xFF800000> : vector<2x8xf32>
    %31 = vector.multi_reduction <maximumf>, %30, %cst_24 [2] : vector<2x8x8xf32> to vector<2x8xf32>
    %32 = vector.shape_cast %31 : vector<2x8xf32> to vector<2x8x1xf32>
    %33 = vector.broadcast %32 : vector<2x8x1xf32> to vector<2x8x8xf32>
    %34 = arith.subf %30, %33 : vector<2x8x8xf32>
    %35 = math.exp %34 : vector<2x8x8xf32>
    %cst_25 = arith.constant dense<0.000000e+00> : vector<2x8xf32>
    %36 = vector.multi_reduction <add>, %35, %cst_25 [2] : vector<2x8x8xf32> to vector<2x8xf32>
    %37 = vector.shape_cast %36 : vector<2x8xf32> to vector<2x8x1xf32>
    %38 = tpu.reciprocal %37 {approx = true} : vector<2x8x1xf32> -> vector<2x8x1xf32>
    %39 = vector.broadcast %38 : vector<2x8x1xf32> to vector<2x8x8xf32>
    %40 = arith.mulf %35, %39 : vector<2x8x8xf32>
    %cst_26 = arith.constant dense<0.000000e+00> : vector<2x8x32xf32>
    %41 = tpu.matmul %40, %27, %cst_26 {dimension_numbers = #tpu.dot_dimension_numbers<[2], [1], [1], [2], [0, 0, 0, 1, 1, 2], [0], [0]>} : vector<2x8x8xf32>, vector<2x8x32xf32>, vector<2x8x32xf32> -> vector<2x8x32xf32>
    %42 = vector.shape_cast %41 : vector<2x8x32xf32> to vector<16x32xf32>
    %cst_27 = arith.constant dense<0.000000e+00> : vector<16x32xf32>
    %43 = tpu.matmul %42, %8, %cst_27 {dimension_numbers = #tpu.dot_dimension_numbers<[1], [0], [0], [1], [0, 0, 1, 1], [], []>} : vector<16x32xf32>, vector<32x32xf32>, vector<16x32xf32> -> vector<16x32xf32>
    %44 = vector.broadcast %16 : vector<1x32xf32> to vector<16x32xf32>
    %45 = arith.addf %43, %44 : vector<16x32xf32>
    %46 = arith.addf %4, %45 : vector<16x32xf32>
    %cst_28 = arith.constant dense<0.000000e+00> : vector<16xf32>
    %47 = vector.multi_reduction <add>, %46, %cst_28 [1] : vector<16x32xf32> to vector<16xf32>
    %48 = vector.shape_cast %47 : vector<16xf32> to vector<16x1xf32>
    %cst_29 = arith.constant 3.200000e+01 : f32
    %49 = vector.broadcast %cst_29 : f32 to vector<16x1xf32>
    %50 = arith.divf %48, %49 : vector<16x1xf32>
    %51 = vector.broadcast %50 : vector<16x1xf32> to vector<16x32xf32>
    %52 = arith.subf %46, %51 : vector<16x32xf32>
    %53 = arith.mulf %52, %52 : vector<16x32xf32>
    %cst_30 = arith.constant dense<0.000000e+00> : vector<16xf32>
    %54 = vector.multi_reduction <add>, %53, %cst_30 [1] : vector<16x32xf32> to vector<16xf32>
    %55 = vector.shape_cast %54 : vector<16xf32> to vector<16x1xf32>
    %cst_31 = arith.constant 3.200000e+01 : f32
    %56 = vector.broadcast %cst_31 : f32 to vector<16x1xf32>
    %57 = arith.divf %55, %56 : vector<16x1xf32>
    %58 = vector.broadcast %50 : vector<16x1xf32> to vector<16x32xf32>
    %59 = arith.subf %46, %58 : vector<16x32xf32>
    %cst_32 = arith.constant 9.99999974E-6 : f32
    %60 = vector.broadcast %cst_32 : f32 to vector<16x1xf32>
    %61 = arith.addf %57, %60 : vector<16x1xf32>
    %62 = math.rsqrt %61 : vector<16x1xf32>
    %63 = vector.broadcast %62 : vector<16x1xf32> to vector<16x32xf32>
    %64 = arith.mulf %59, %63 : vector<16x32xf32>
    %65 = vector.broadcast %18 : vector<1x32xf32> to vector<16x32xf32>
    %66 = arith.mulf %64, %65 : vector<16x32xf32>
    %67 = vector.broadcast %19 : vector<1x32xf32> to vector<16x32xf32>
    %68 = arith.addf %66, %67 : vector<16x32xf32>
    %cst_33 = arith.constant dense<0.000000e+00> : vector<16x64xf32>
    %69 = tpu.matmul %68, %10, %cst_33 {dimension_numbers = #tpu.dot_dimension_numbers<[1], [0], [0], [1], [0, 0, 1, 1], [], []>} : vector<16x32xf32>, vector<32x64xf32>, vector<16x64xf32> -> vector<16x64xf32>
    %70 = vector.broadcast %23 : vector<1x64xf32> to vector<16x64xf32>
    %71 = arith.addf %69, %70 : vector<16x64xf32>
    %cst_34 = arith.constant 0.000000e+00 : f32
    %72 = vector.broadcast %cst_34 : f32 to vector<16x64xf32>
    %73 = arith.maximumf %71, %72 : vector<16x64xf32>
    %cst_35 = arith.constant dense<0.000000e+00> : vector<16x32xf32>
    %74 = tpu.matmul %73, %12, %cst_35 {dimension_numbers = #tpu.dot_dimension_numbers<[1], [0], [0], [1], [0, 0, 1, 1], [], []>} : vector<16x64xf32>, vector<64x32xf32>, vector<16x32xf32> -> vector<16x32xf32>
    %75 = vector.broadcast %17 : vector<1x32xf32> to vector<16x32xf32>
    %76 = arith.addf %74, %75 : vector<16x32xf32>
    %77 = arith.addf %68, %76 : vector<16x32xf32>
    %cst_36 = arith.constant dense<0.000000e+00> : vector<16xf32>
    %78 = vector.multi_reduction <add>, %77, %cst_36 [1] : vector<16x32xf32> to vector<16xf32>
    %79 = vector.shape_cast %78 : vector<16xf32> to vector<16x1xf32>
    %cst_37 = arith.constant 3.200000e+01 : f32
    %80 = vector.broadcast %cst_37 : f32 to vector<16x1xf32>
    %81 = arith.divf %79, %80 : vector<16x1xf32>
    %82 = vector.broadcast %81 : vector<16x1xf32> to vector<16x32xf32>
    %83 = arith.subf %77, %82 : vector<16x32xf32>
    %84 = arith.mulf %83, %83 : vector<16x32xf32>
    %cst_38 = arith.constant dense<0.000000e+00> : vector<16xf32>
    %85 = vector.multi_reduction <add>, %84, %cst_38 [1] : vector<16x32xf32> to vector<16xf32>
    %86 = vector.shape_cast %85 : vector<16xf32> to vector<16x1xf32>
    %cst_39 = arith.constant 3.200000e+01 : f32
    %87 = vector.broadcast %cst_39 : f32 to vector<16x1xf32>
    %88 = arith.divf %86, %87 : vector<16x1xf32>
    %89 = vector.broadcast %81 : vector<16x1xf32> to vector<16x32xf32>
    %90 = arith.subf %77, %89 : vector<16x32xf32>
    %cst_40 = arith.constant 9.99999974E-6 : f32
    %91 = vector.broadcast %cst_40 : f32 to vector<16x1xf32>
    %92 = arith.addf %88, %91 : vector<16x1xf32>
    %93 = math.rsqrt %92 : vector<16x1xf32>
    %94 = vector.broadcast %93 : vector<16x1xf32> to vector<16x32xf32>
    %95 = arith.mulf %90, %94 : vector<16x32xf32>
    %96 = vector.broadcast %20 : vector<1x32xf32> to vector<16x32xf32>
    %97 = arith.mulf %95, %96 : vector<16x32xf32>
    %98 = vector.broadcast %21 : vector<1x32xf32> to vector<16x32xf32>
    %99 = arith.addf %97, %98 : vector<16x32xf32>
    %c1 = arith.constant 1 : index
    %c0_41 = arith.constant 0 : index
    %c0_42 = arith.constant 0 : index
    %100 = vector.load %arg3[%c1, %c0_41, %c0_42] : memref<2x32x32xf32, #tpu.memory_space<vmem>>, vector<1x32x32xf32>
    %101 = vector.shape_cast %100 : vector<1x32x32xf32> to vector<32x32xf32>
    %c1_43 = arith.constant 1 : index
    %c0_44 = arith.constant 0 : index
    %c0_45 = arith.constant 0 : index
    %102 = vector.load %arg4[%c1_43, %c0_44, %c0_45] : memref<2x32x32xf32, #tpu.memory_space<vmem>>, vector<1x32x32xf32>
    %103 = vector.shape_cast %102 : vector<1x32x32xf32> to vector<32x32xf32>
    %c1_46 = arith.constant 1 : index
    %c0_47 = arith.constant 0 : index
    %c0_48 = arith.constant 0 : index
    %104 = vector.load %arg5[%c1_46, %c0_47, %c0_48] : memref<2x32x64xf32, #tpu.memory_space<vmem>>, vector<1x32x64xf32>
    %105 = vector.shape_cast %104 : vector<1x32x64xf32> to vector<32x64xf32>
    %c1_49 = arith.constant 1 : index
    %c0_50 = arith.constant 0 : index
    %c0_51 = arith.constant 0 : index
    %106 = vector.load %arg6[%c1_49, %c0_50, %c0_51] : memref<2x64x32xf32, #tpu.memory_space<vmem>>, vector<1x64x32xf32>
    %107 = vector.shape_cast %106 : vector<1x64x32xf32> to vector<64x32xf32>
    %c1_52 = arith.constant 1 : index
    %c0_53 = arith.constant 0 : index
    %c0_54 = arith.constant 0 : index
    %108 = vector.load %arg7[%c1_52, %c0_53, %c0_54] : memref<2x7x32xf32, #tpu.memory_space<vmem>>, vector<1x7x32xf32>
    %109 = vector.shape_cast %108 : vector<1x7x32xf32> to vector<7x32xf32>
    %110 = vector.extract_strided_slice %109 {offsets = [0, 0], sizes = [1, 32], strides = [1, 1]} : vector<7x32xf32> to vector<1x32xf32>
    %111 = vector.extract_strided_slice %109 {offsets = [1, 0], sizes = [1, 32], strides = [1, 1]} : vector<7x32xf32> to vector<1x32xf32>
    %112 = vector.extract_strided_slice %109 {offsets = [2, 0], sizes = [1, 32], strides = [1, 1]} : vector<7x32xf32> to vector<1x32xf32>
    %113 = vector.extract_strided_slice %109 {offsets = [3, 0], sizes = [1, 32], strides = [1, 1]} : vector<7x32xf32> to vector<1x32xf32>
    %114 = vector.extract_strided_slice %109 {offsets = [4, 0], sizes = [1, 32], strides = [1, 1]} : vector<7x32xf32> to vector<1x32xf32>
    %115 = vector.extract_strided_slice %109 {offsets = [5, 0], sizes = [1, 32], strides = [1, 1]} : vector<7x32xf32> to vector<1x32xf32>
    %116 = vector.extract_strided_slice %109 {offsets = [6, 0], sizes = [1, 32], strides = [1, 1]} : vector<7x32xf32> to vector<1x32xf32>
    %c1_55 = arith.constant 1 : index
    %c0_56 = arith.constant 0 : index
    %c0_57 = arith.constant 0 : index
    %117 = vector.load %arg8[%c1_55, %c0_56, %c0_57] : memref<2x1x64xf32, #tpu.memory_space<vmem>>, vector<1x1x64xf32>
    %118 = vector.shape_cast %117 : vector<1x1x64xf32> to vector<1x64xf32>
    %cst_58 = arith.constant dense<0.000000e+00> : vector<16x32xf32>
    %119 = tpu.matmul %99, %101, %cst_58 {dimension_numbers = #tpu.dot_dimension_numbers<[1], [0], [0], [1], [0, 0, 1, 1], [], []>} : vector<16x32xf32>, vector<32x32xf32>, vector<16x32xf32> -> vector<16x32xf32>
    %120 = vector.broadcast %110 : vector<1x32xf32> to vector<16x32xf32>
    %121 = arith.addf %119, %120 : vector<16x32xf32>
    %122 = vector.shape_cast %121 : vector<16x32xf32> to vector<2x8x32xf32>
    %cst_59 = arith.constant dense<0.000000e+00> : vector<2x8x8xf32>
    %123 = tpu.matmul %122, %122, %cst_59 {dimension_numbers = #tpu.dot_dimension_numbers<[2], [2], [1], [1], [0, 0, 0, 1, 1, 1], [0], [0]>} : vector<2x8x32xf32>, vector<2x8x32xf32>, vector<2x8x8xf32> -> vector<2x8x8xf32>
    %cst_60 = arith.constant 0.176776692 : f32
    %124 = vector.broadcast %cst_60 : f32 to vector<2x8x8xf32>
    %125 = arith.mulf %123, %124 : vector<2x8x8xf32>
    %cst_61 = arith.constant dense<0xFF800000> : vector<2x8xf32>
    %126 = vector.multi_reduction <maximumf>, %125, %cst_61 [2] : vector<2x8x8xf32> to vector<2x8xf32>
    %127 = vector.shape_cast %126 : vector<2x8xf32> to vector<2x8x1xf32>
    %128 = vector.broadcast %127 : vector<2x8x1xf32> to vector<2x8x8xf32>
    %129 = arith.subf %125, %128 : vector<2x8x8xf32>
    %130 = math.exp %129 : vector<2x8x8xf32>
    %cst_62 = arith.constant dense<0.000000e+00> : vector<2x8xf32>
    %131 = vector.multi_reduction <add>, %130, %cst_62 [2] : vector<2x8x8xf32> to vector<2x8xf32>
    %132 = vector.shape_cast %131 : vector<2x8xf32> to vector<2x8x1xf32>
    %133 = tpu.reciprocal %132 {approx = true} : vector<2x8x1xf32> -> vector<2x8x1xf32>
    %134 = vector.broadcast %133 : vector<2x8x1xf32> to vector<2x8x8xf32>
    %135 = arith.mulf %130, %134 : vector<2x8x8xf32>
    %cst_63 = arith.constant dense<0.000000e+00> : vector<2x8x32xf32>
    %136 = tpu.matmul %135, %122, %cst_63 {dimension_numbers = #tpu.dot_dimension_numbers<[2], [1], [1], [2], [0, 0, 0, 1, 1, 2], [0], [0]>} : vector<2x8x8xf32>, vector<2x8x32xf32>, vector<2x8x32xf32> -> vector<2x8x32xf32>
    %137 = vector.shape_cast %136 : vector<2x8x32xf32> to vector<16x32xf32>
    %cst_64 = arith.constant dense<0.000000e+00> : vector<16x32xf32>
    %138 = tpu.matmul %137, %103, %cst_64 {dimension_numbers = #tpu.dot_dimension_numbers<[1], [0], [0], [1], [0, 0, 1, 1], [], []>} : vector<16x32xf32>, vector<32x32xf32>, vector<16x32xf32> -> vector<16x32xf32>
    %139 = vector.broadcast %111 : vector<1x32xf32> to vector<16x32xf32>
    %140 = arith.addf %138, %139 : vector<16x32xf32>
    %141 = arith.addf %99, %140 : vector<16x32xf32>
    %cst_65 = arith.constant dense<0.000000e+00> : vector<16xf32>
    %142 = vector.multi_reduction <add>, %141, %cst_65 [1] : vector<16x32xf32> to vector<16xf32>
    %143 = vector.shape_cast %142 : vector<16xf32> to vector<16x1xf32>
    %cst_66 = arith.constant 3.200000e+01 : f32
    %144 = vector.broadcast %cst_66 : f32 to vector<16x1xf32>
    %145 = arith.divf %143, %144 : vector<16x1xf32>
    %146 = vector.broadcast %145 : vector<16x1xf32> to vector<16x32xf32>
    %147 = arith.subf %141, %146 : vector<16x32xf32>
    %148 = arith.mulf %147, %147 : vector<16x32xf32>
    %cst_67 = arith.constant dense<0.000000e+00> : vector<16xf32>
    %149 = vector.multi_reduction <add>, %148, %cst_67 [1] : vector<16x32xf32> to vector<16xf32>
    %150 = vector.shape_cast %149 : vector<16xf32> to vector<16x1xf32>
    %cst_68 = arith.constant 3.200000e+01 : f32
    %151 = vector.broadcast %cst_68 : f32 to vector<16x1xf32>
    %152 = arith.divf %150, %151 : vector<16x1xf32>
    %153 = vector.broadcast %145 : vector<16x1xf32> to vector<16x32xf32>
    %154 = arith.subf %141, %153 : vector<16x32xf32>
    %cst_69 = arith.constant 9.99999974E-6 : f32
    %155 = vector.broadcast %cst_69 : f32 to vector<16x1xf32>
    %156 = arith.addf %152, %155 : vector<16x1xf32>
    %157 = math.rsqrt %156 : vector<16x1xf32>
    %158 = vector.broadcast %157 : vector<16x1xf32> to vector<16x32xf32>
    %159 = arith.mulf %154, %158 : vector<16x32xf32>
    %160 = vector.broadcast %113 : vector<1x32xf32> to vector<16x32xf32>
    %161 = arith.mulf %159, %160 : vector<16x32xf32>
    %162 = vector.broadcast %114 : vector<1x32xf32> to vector<16x32xf32>
    %163 = arith.addf %161, %162 : vector<16x32xf32>
    %cst_70 = arith.constant dense<0.000000e+00> : vector<16x64xf32>
    %164 = tpu.matmul %163, %105, %cst_70 {dimension_numbers = #tpu.dot_dimension_numbers<[1], [0], [0], [1], [0, 0, 1, 1], [], []>} : vector<16x32xf32>, vector<32x64xf32>, vector<16x64xf32> -> vector<16x64xf32>
    %165 = vector.broadcast %118 : vector<1x64xf32> to vector<16x64xf32>
    %166 = arith.addf %164, %165 : vector<16x64xf32>
    %cst_71 = arith.constant 0.000000e+00 : f32
    %167 = vector.broadcast %cst_71 : f32 to vector<16x64xf32>
    %168 = arith.maximumf %166, %167 : vector<16x64xf32>
    %cst_72 = arith.constant dense<0.000000e+00> : vector<16x32xf32>
    %169 = tpu.matmul %168, %107, %cst_72 {dimension_numbers = #tpu.dot_dimension_numbers<[1], [0], [0], [1], [0, 0, 1, 1], [], []>} : vector<16x64xf32>, vector<64x32xf32>, vector<16x32xf32> -> vector<16x32xf32>
    %170 = vector.broadcast %112 : vector<1x32xf32> to vector<16x32xf32>
    %171 = arith.addf %169, %170 : vector<16x32xf32>
    %172 = arith.addf %163, %171 : vector<16x32xf32>
    %cst_73 = arith.constant dense<0.000000e+00> : vector<16xf32>
    %173 = vector.multi_reduction <add>, %172, %cst_73 [1] : vector<16x32xf32> to vector<16xf32>
    %174 = vector.shape_cast %173 : vector<16xf32> to vector<16x1xf32>
    %cst_74 = arith.constant 3.200000e+01 : f32
    %175 = vector.broadcast %cst_74 : f32 to vector<16x1xf32>
    %176 = arith.divf %174, %175 : vector<16x1xf32>
    %177 = vector.broadcast %176 : vector<16x1xf32> to vector<16x32xf32>
    %178 = arith.subf %172, %177 : vector<16x32xf32>
    %179 = arith.mulf %178, %178 : vector<16x32xf32>
    %cst_75 = arith.constant dense<0.000000e+00> : vector<16xf32>
    %180 = vector.multi_reduction <add>, %179, %cst_75 [1] : vector<16x32xf32> to vector<16xf32>
    %181 = vector.shape_cast %180 : vector<16xf32> to vector<16x1xf32>
    %cst_76 = arith.constant 3.200000e+01 : f32
    %182 = vector.broadcast %cst_76 : f32 to vector<16x1xf32>
    %183 = arith.divf %181, %182 : vector<16x1xf32>
    %184 = vector.broadcast %176 : vector<16x1xf32> to vector<16x32xf32>
    %185 = arith.subf %172, %184 : vector<16x32xf32>
    %cst_77 = arith.constant 9.99999974E-6 : f32
    %186 = vector.broadcast %cst_77 : f32 to vector<16x1xf32>
    %187 = arith.addf %183, %186 : vector<16x1xf32>
    %188 = math.rsqrt %187 : vector<16x1xf32>
    %189 = vector.broadcast %188 : vector<16x1xf32> to vector<16x32xf32>
    %190 = arith.mulf %185, %189 : vector<16x32xf32>
    %191 = vector.broadcast %115 : vector<1x32xf32> to vector<16x32xf32>
    %192 = arith.mulf %190, %191 : vector<16x32xf32>
    %193 = vector.broadcast %116 : vector<1x32xf32> to vector<16x32xf32>
    %194 = arith.addf %192, %193 : vector<16x32xf32>
    %c0_78 = arith.constant 0 : index
    %c0_79 = arith.constant 0 : index
    %195 = vector.load %arg9[%c0_78, %c0_79] : memref<16x32xf32, #tpu.memory_space<vmem>>, vector<16x32xf32>
    tpu.vector_store %arg9[%c0_78, %c0_79], %194 {strides = array<i32>} : memref<16x32xf32, #tpu.memory_space<vmem>>, vector<16x32xf32>,
    return
  }
  func.func @transform_0(%arg0: i32) -> (i32, i32) {
    %c0_i32 = arith.constant 0 : i32
    %c0_i32_0 = arith.constant 0 : i32
    %c0_i32_1 = arith.constant 0 : i32
    return %c0_i32, %c0_i32_0 : i32, i32
  }
  func.func @transform_1(%arg0: i32) -> (i32, i32) {
    %c0_i32 = arith.constant 0 : i32
    %c0_i32_0 = arith.constant 0 : i32
    %c0_i32_1 = arith.constant 0 : i32
    return %c0_i32, %c0_i32_0 : i32, i32
  }
  func.func @transform_2(%arg0: i32) -> (i32, i32, i32) {
    %c0_i32 = arith.constant 0 : i32
    %c0_i32_0 = arith.constant 0 : i32
    %c0_i32_1 = arith.constant 0 : i32
    %c0_i32_2 = arith.constant 0 : i32
    return %c0_i32, %c0_i32_0, %c0_i32_1 : i32, i32, i32
  }
  func.func @transform_3(%arg0: i32) -> (i32, i32, i32) {
    %c0_i32 = arith.constant 0 : i32
    %c0_i32_0 = arith.constant 0 : i32
    %c0_i32_1 = arith.constant 0 : i32
    %c0_i32_2 = arith.constant 0 : i32
    return %c0_i32, %c0_i32_0, %c0_i32_1 : i32, i32, i32
  }
  func.func @transform_4(%arg0: i32) -> (i32, i32, i32) {
    %c0_i32 = arith.constant 0 : i32
    %c0_i32_0 = arith.constant 0 : i32
    %c0_i32_1 = arith.constant 0 : i32
    %c0_i32_2 = arith.constant 0 : i32
    return %c0_i32, %c0_i32_0, %c0_i32_1 : i32, i32, i32
  }
  func.func @transform_5(%arg0: i32) -> (i32, i32, i32) {
    %c0_i32 = arith.constant 0 : i32
    %c0_i32_0 = arith.constant 0 : i32
    %c0_i32_1 = arith.constant 0 : i32
    %c0_i32_2 = arith.constant 0 : i32
    return %c0_i32, %c0_i32_0, %c0_i32_1 : i32, i32, i32
  }
  func.func @transform_6(%arg0: i32) -> (i32, i32, i32) {
    %c0_i32 = arith.constant 0 : i32
    %c0_i32_0 = arith.constant 0 : i32
    %c0_i32_1 = arith.constant 0 : i32
    %c0_i32_2 = arith.constant 0 : i32
    return %c0_i32, %c0_i32_0, %c0_i32_1 : i32, i32, i32
  }
  func.func @transform_7(%arg0: i32) -> (i32, i32, i32) {
    %c0_i32 = arith.constant 0 : i32
    %c0_i32_0 = arith.constant 0 : i32
    %c0_i32_1 = arith.constant 0 : i32
    %c0_i32_2 = arith.constant 0 : i32
    return %c0_i32, %c0_i32_0, %c0_i32_1 : i32, i32, i32
  }
  func.func @transform_8(%arg0: i32) -> (i32, i32) {
    %c0_i32 = arith.constant 0 : i32
    %c0_i32_0 = arith.constant 0 : i32
    %c0_i32_1 = arith.constant 0 : i32
    return %c0_i32, %c0_i32_0 : i32, i32
  }
}

</mosaic_0001>

<llo_original>
// kernel: encoder_forward.1
$region0: #{encoder_forward.1}
  #allocation0 [shape = 'u32[]', space=smem, size = 0x4, offset = 0x4, fixed_abs, tag = 'smem constant byte address 0x4 - core index']
  #allocation1 [shape = 'u32[144,128]{1,0:T(1,128)}', space=vmem, size = 0x12000, scoped, tag = 'internal scratch']
  %s0 = inlined_call_operand.vmem [shape: f32[16,32], index: 0, kind: input, shape index: {}]
  %s1 = inlined_call_operand.vmem [shape: f32[16,32], index: 1, kind: input, shape index: {}]
  %s2 = inlined_call_operand.vmem [shape: f32[2,32,32], index: 2, kind: input, shape index: {}]
  %s3 = inlined_call_operand.vmem [shape: f32[2,32,32], index: 3, kind: input, shape index: {}]
  %s4 = inlined_call_operand.vmem [shape: f32[2,32,64], index: 4, kind: input, shape index: {}]
  %s5 = inlined_call_operand.vmem [shape: f32[2,64,32], index: 5, kind: input, shape index: {}]
  %s6 = inlined_call_operand.vmem [shape: f32[2,7,32], index: 6, kind: input, shape index: {}]
  %s7 = inlined_call_operand.vmem [shape: f32[2,1,64], index: 7, kind: input, shape index: {}]
  %s8 = inlined_call_operand.hbm [shape: f32[16,32], index: 8, kind: output, shape index: {}]
  %s9 = sld [smem:[#allocation0]]
  $region42: #{encoder_forward.1} parent=0
    _
  %s11 = ssub.s32 1, %s9
  %s12 = scalar_select 0, %s11, %s9
  $region1: #{encoder_forward.1} parent=0
    #allocation2 [shape = 'u8[8192]{0}', space=vmem, size = 0x2000, scoped, tag = 'output window, operand 0, single buffered']
    #allocation3 [shape = 's32[1]{0}', space=sflag, size = 0x4, scoped, tag = 'scoped memory for encoder_forward.1']
    %13 = vsyncpa [#allocation3], 0
    // Predicated region
    $region2: #{encoder_forward.1} parent=1 // pred_check
      _
    $region3: #{encoder_forward.1} parent=1 // pred_check_branch
      %15 = sbr.rel (0) target = $region5
    $region4: #{encoder_forward.1} parent=1 // pred_region
      _
    $region5: #{encoder_forward.1} parent=1 // pred_fallthru
      _
    // Predicated region
    $region6: #{encoder_forward.1} parent=1 // pred_check
      _
    $region7: #{encoder_forward.1} parent=1 // pred_check_branch
      %17 = sbr.rel (0) target = $region9
    $region8: #{encoder_forward.1} parent=1 // pred_region
      _
    $region9: #{encoder_forward.1} parent=1 // pred_fallthru
      _
    // Predicated region
    $region10: #{encoder_forward.1} parent=1 // pred_check
      _
    $region11: #{encoder_forward.1} parent=1 // pred_check_branch
      %19 = sbr.rel (0) target = $region13
    $region12: #{encoder_forward.1} parent=1 // pred_region
      _
    $region13: #{encoder_forward.1} parent=1 // pred_fallthru
      _
    // Predicated region
    $region14: #{encoder_forward.1} parent=1 // pred_check
      _
    $region15: #{encoder_forward.1} parent=1 // pred_check_branch
      %21 = sbr.rel (0) target = $region17
    $region16: #{encoder_forward.1} parent=1 // pred_region
      _
    $region17: #{encoder_forward.1} parent=1 // pred_fallthru
      _
    // Predicated region
    $region18: #{encoder_forward.1} parent=1 // pred_check
      _
    $region19: #{encoder_forward.1} parent=1 // pred_check_branch
      %23 = sbr.rel (0) target = $region21
    $region20: #{encoder_forward.1} parent=1 // pred_region
      _
    $region21: #{encoder_forward.1} parent=1 // pred_fallthru
      _
    // Predicated region
    $region22: #{encoder_forward.1} parent=1 // pred_check
      _
    $region23: #{encoder_forward.1} parent=1 // pred_check_branch
      %25 = sbr.rel (0) target = $region25
    $region24: #{encoder_forward.1} parent=1 // pred_region
      _
    $region25: #{encoder_forward.1} parent=1 // pred_fallthru
      _
    // Predicated region
    $region26: #{encoder_forward.1} parent=1 // pred_check
      _
    $region27: #{encoder_forward.1} parent=1 // pred_check_branch
      %27 = sbr.rel (0) target = $region29
    $region28: #{encoder_forward.1} parent=1 // pred_region
      _
    $region29: #{encoder_forward.1} parent=1 // pred_fallthru
      _
    // Predicated region
    $region30: #{encoder_forward.1} parent=1 // pred_check
      _
    $region31: #{encoder_forward.1} parent=1 // pred_check_branch
      %29 = sbr.rel (0) target = $region33
    $region32: #{encoder_forward.1} parent=1 // pred_region
      _
    $region33: #{encoder_forward.1} parent=1 // pred_fallthru
      _
    %v30 = vld [vmem:[%s0] sm:$0xff]
    %v31 = vld [vmem:[%s0 + $0x8] sm:$0xff]
    %v32 = vmul.f32 %v30, 32.0
    %v33 = vmul.f32 %v31, 32.0
    %v34 = vld [vmem:[%s1] sm:$0xff]
    %v35 = vld [vmem:[%s1 + $0x8] sm:$0xff]
    %v36 = vadd.f32 %v32, %v34
    %v37 = vadd.f32 %v33, %v35
    %v38 = vld [vmem:[%s2] sm:$0xff]
    %v39 = vld [vmem:[%s2 + $0x8] sm:$0xff]
    %v40 = vld [vmem:[%s2 + $0x10] sm:$0xff]
    %v41 = vld [vmem:[%s2 + $0x18] sm:$0xff]
    %v42 = vld [vmem:[%s3] sm:$0xff]
    %v43 = vld [vmem:[%s3 + $0x8] sm:$0xff]
    %v44 = vld [vmem:[%s3 + $0x10] sm:$0xff]
    %v45 = vld [vmem:[%s3 + $0x18] sm:$0xff]
    %v46 = vld [vmem:[%s4] sm:$0xff]
    %v47 = vld [vmem:[%s4 + $0x8] sm:$0xff]
    %v48 = vld [vmem:[%s4 + $0x10] sm:$0xff]
    %v49 = vld [vmem:[%s4 + $0x18] sm:$0xff]
    %v50 = vld [vmem:[%s5] sm:$0xff]
    %v51 = vld [vmem:[%s5 + $0x8] sm:$0xff]
    %v52 = vld [vmem:[%s5 + $0x10] sm:$0xff]
    %v53 = vld [vmem:[%s5 + $0x18] sm:$0xff]
    %v54 = vld [vmem:[%s5 + $0x20] sm:$0xff]
    %v55 = vld [vmem:[%s5 + $0x28] sm:$0xff]
    %v56 = vld [vmem:[%s5 + $0x30] sm:$0xff]
    %v57 = vld [vmem:[%s5 + $0x38] sm:$0xff]
    %v58 = vld [vmem:[%s6] sm:$0x7f]
    %v59 = vld [vmem:[%s7] sm:$0x1]
    %v60 = vlaneseq
    %v61 = vshrl.u32 %v60, 7
    %v62 = vsub.s32 0, %v61
    %v63 = vrot.slane %v58, %v62
    %vm64 = vcmask 261120
    %v66 = vsel %vm64, %v36, 0
    %v69 = vsel %vm64, %v37, 0
    %71 = vmatprep.subr.mxu0 0.0
    %72 = vmatpush1.msra.mxu0 0.0
    %73 = vmatprep.subr.mxu0 0.0
    %74 = vmatpush1.msra.mxu0 0.0
    %75 = vmatprep.subr.mxu0 0.0
    %76 = vmatpush1.msra.mxu0 0.0
    %77 = vmatprep.subr.mxu0 0.0
    %78 = vmatpush1.msra.mxu0 0.0
    %79 = vmatprep.subr.mxu0 0.0
    %80 = vmatpush1.msra.mxu0 0.0
    %81 = vmatprep.subr.mxu0 0.0
    %82 = vmatpush1.msra.mxu0 0.0
    %83 = vmatprep.subr.mxu0 0.0
    %84 = vmatpush1.msra.mxu0 0.0
    %85 = vmatprep.subr.mxu0 0.0
    %86 = vmatpush1.msra.mxu0 0.0
    %87 = vmatprep.subr.mxu0 0.0
    %88 = vmatpush1.msra.mxu0 0.0
    %89 = vmatprep.subr.mxu0 0.0
    %90 = vmatpush1.msra.mxu0 0.0
    %91 = vmatprep.subr.mxu0 0.0
    %92 = vmatpush1.msra.mxu0 0.0
    %93 = vmatprep.subr.mxu0 0.0
    %94 = vmatpush1.msra.mxu0 0.0
    %95 = vmatprep.subr.mxu0 0.0
    %96 = vmatpush1.msra.mxu0 %v41
    %97 = vmatprep.subr.mxu0 0.0
    %98 = vmatpush1.msra.mxu0 %v40
    %99 = vmatprep.subr.mxu0 0.0
    %100 = vmatpush1.msra.mxu0 %v39
    %101 = vmatprep.subr.mxu0 0.0
    %102 = vmatpush1.msra.mxu0 %v38
    %103 = vmatprep.subr.mxu0 0.0
    %104 = vmatpush2.msra.mxu0 0.0
    %105 = vmatprep.subr.mxu0 0.0
    %106 = vmatpush2.msra.mxu0 0.0
    %107 = vmatprep.subr.mxu0 0.0
    %108 = vmatpush2.msra.mxu0 0.0
    %109 = vmatprep.subr.mxu0 0.0
    %110 = vmatpush2.msra.mxu0 0.0
    %111 = vmatprep.subr.mxu0 0.0
    %112 = vmatpush2.msra.mxu0 0.0
    %113 = vmatprep.subr.mxu0 0.0
    %114 = vmatpush2.msra.mxu0 0.0
    %115 = vmatprep.subr.mxu0 0.0
    %116 = vmatpush2.msra.mxu0 0.0
    %117 = vmatprep.subr.mxu0 0.0
    %118 = vmatpush2.msra.mxu0 0.0
    %119 = vmatprep.subr.mxu0 0.0
    %120 = vmatpush2.msra.mxu0 0.0
    %121 = vmatprep.subr.mxu0 0.0
    %122 = vmatpush2.msra.mxu0 0.0
    %123 = vmatprep.subr.mxu0 0.0
    %124 = vmatpush2.msra.mxu0 0.0
    %125 = vmatprep.subr.mxu0 0.0
    %126 = vmatpush2.msra.mxu0 0.0
    %127 = vmatprep.subr.mxu0 0.0
    %128 = vmatpush2.msra.mxu0 0.0
    %129 = vmatprep.subr.mxu0 0.0
    %130 = vmatpush2.msra.mxu0 0.0
    %131 = vmatprep.subr.mxu0 0.0
    %132 = vmatpush2.msra.mxu0 0.0
    %133 = vmatprep.subr.mxu0 0.0
    %134 = vmatpush2.msra.mxu0 0.0
    %135 = vmatprep.mubr.f32.mxu0 0.0
    %136 = vmatmul.mubr.f32.gmra.mxu0 %v66
    %v137 = vpop.f32.mrf.mxu0
    %v138 = vadd.f32 %v63, %v137
    %v139 = vpop.f32.mrf.mxu0
    %140 = vmatprep.mubr.f32.mxu0 0.0
    %141 = vmatmul.mubr.f32.gmra.mxu0 %v69
    %v142 = vpop.f32.mrf.mxu0
    %v143 = vadd.f32 %v63, %v142
    %v144 = vpop.f32.mrf.mxu0
    %145 = vdwg.mxu0
    %v147 = vsel %vm64, %v138, 0
    %149 = vmatprep.subr.mxu0 0.0
    %150 = vmatpush1.xpose.msra.mxu0 0.0
    %151 = vmatprep.subr.mxu0 0.0
    %152 = vmatpush1.xpose.msra.mxu0 0.0
    %153 = vmatprep.subr.mxu0 0.0
    %154 = vmatpush1.xpose.msra.mxu0 0.0
    %155 = vmatprep.subr.mxu0 0.0
    %156 = vmatpush1.xpose.msra.mxu0 0.0
    %157 = vmatprep.subr.mxu0 0.0
    %158 = vmatpush1.xpose.msra.mxu0 0.0
    %159 = vmatprep.subr.mxu0 0.0
    %160 = vmatpush1.xpose.msra.mxu0 0.0
    %161 = vmatprep.subr.mxu0 0.0
    %162 = vmatpush1.xpose.msra.mxu0 0.0
    %163 = vmatprep.subr.mxu0 0.0
    %164 = vmatpush1.xpose.msra.mxu0 0.0
    %165 = vmatprep.subr.mxu0 0.0
    %166 = vmatpush1.xpose.msra.mxu0 0.0
    %167 = vmatprep.subr.mxu0 0.0
    %168 = vmatpush1.xpose.msra.mxu0 0.0
    %169 = vmatprep.subr.mxu0 0.0
    %170 = vmatpush1.xpose.msra.mxu0 0.0
    %171 = vmatprep.subr.mxu0 0.0
    %172 = vmatpush1.xpose.msra.mxu0 0.0
    %173 = vmatprep.subr.mxu0 0.0
    %174 = vmatpush1.xpose.msra.mxu0 0.0
    %175 = vmatprep.subr.mxu0 0.0
    %176 = vmatpush1.xpose.msra.mxu0 0.0
    %177 = vmatprep.subr.mxu0 0.0
    %178 = vmatpush1.xpose.msra.mxu0 0.0
    %179 = vmatprep.subr.mxu0 0.0
    %180 = vmatpush1.xpose.msra.mxu0 %v147
    %181 = vmatprep.subr.mxu0 0.0
    %182 = vmatpush2.xpose.msra.mxu0 0.0
    %183 = vmatprep.subr.mxu0 0.0
    %184 = vmatpush2.xpose.msra.mxu0 0.0
    %185 = vmatprep.subr.mxu0 0.0
    %186 = vmatpush2.xpose.msra.mxu0 0.0
    %187 = vmatprep.subr.mxu0 0.0
    %188 = vmatpush2.xpose.msra.mxu0 0.0
    %189 = vmatprep.subr.mxu0 0.0
    %190 = vmatpush2.xpose.msra.mxu0 0.0
    %191 = vmatprep.subr.mxu0 0.0
    %192 = vmatpush2.xpose.msra.mxu0 0.0
    %193 = vmatprep.subr.mxu0 0.0
    %194 = vmatpush2.xpose.msra.mxu0 0.0
    %195 = vmatprep.subr.mxu0 0.0
    %196 = vmatpush2.xpose.msra.mxu0 0.0
    %197 = vmatprep.subr.mxu0 0.0
    %198 = vmatpush2.xpose.msra.mxu0 0.0
    %199 = vmatprep.subr.mxu0 0.0
    %200 = vmatpush2.xpose.msra.mxu0 0.0
    %201 = vmatprep.subr.mxu0 0.0
    %202 = vmatpush2.xpose.msra.mxu0 0.0
    %203 = vmatprep.subr.mxu0 0.0
    %204 = vmatpush2.xpose.msra.mxu0 0.0
    %205 = vmatprep.subr.mxu0 0.0
    %206 = vmatpush2.xpose.msra.mxu0 0.0
    %207 = vmatprep.subr.mxu0 0.0
    %208 = vmatpush2.xpose.msra.mxu0 0.0
    %209 = vmatprep.subr.mxu0 0.0
    %210 = vmatpush2.xpose.msra.mxu0 0.0
    %211 = vmatprep.subr.mxu0 0.0
    %212 = vmatpush2.xpose.msra.mxu0 0.0
    %213 = vmatprep.mubr.f32.mxu0 0.0
    %214 = vmatmul.mubr.f32.gmra.mxu0 %v147
    %v215 = vpop.f32.mrf.mxu0
    %v216 = vadd.f32 0.0, %v215
    %v217 = vpop.f32.mrf.mxu0
    %218 = vdwg.mxu0
    %v220 = vsel %vm64, %v143, 0
    %222 = vmatprep.subr.mxu0 0.0
    %223 = vmatpush1.xpose.msra.mxu0 0.0
    %224 = vmatprep.subr.mxu0 0.0
    %225 = vmatpush1.xpose.msra.mxu0 0.0
    %226 = vmatprep.subr.mxu0 0.0
    %227 = vmatpush1.xpose.msra.mxu0 0.0
    %228 = vmatprep.subr.mxu0 0.0
    %229 = vmatpush1.xpose.msra.mxu0 0.0
    %230 = vmatprep.subr.mxu0 0.0
    %231 = vmatpush1.xpose.msra.mxu0 0.0
    %232 = vmatprep.subr.mxu0 0.0
    %233 = vmatpush1.xpose.msra.mxu0 0.0
    %234 = vmatprep.subr.mxu0 0.0
    %235 = vmatpush1.xpose.msra.mxu0 0.0
    %236 = vmatprep.subr.mxu0 0.0
    %237 = vmatpush1.xpose.msra.mxu0 0.0
    %238 = vmatprep.subr.mxu0 0.0
    %239 = vmatpush1.xpose.msra.mxu0 0.0
    %240 = vmatprep.subr.mxu0 0.0
    %241 = vmatpush1.xpose.msra.mxu0 0.0
    %242 = vmatprep.subr.mxu0 0.0
    %243 = vmatpush1.xpose.msra.mxu0 0.0
    %244 = vmatprep.subr.mxu0 0.0
    %245 = vmatpush1.xpose.msra.mxu0 0.0
    %246 = vmatprep.subr.mxu0 0.0
    %247 = vmatpush1.xpose.msra.mxu0 0.0
    %248 = vmatprep.subr.mxu0 0.0
    %249 = vmatpush1.xpose.msra.mxu0 0.0
    %250 = vmatprep.subr.mxu0 0.0
    %251 = vmatpush1.xpose.msra.mxu0 0.0
    %252 = vmatprep.subr.mxu0 0.0
    %253 = vmatpush1.xpose.msra.mxu0 %v220
    %254 = vmatprep.subr.mxu0 0.0
    %255 = vmatpush2.xpose.msra.mxu0 0.0
    %256 = vmatprep.subr.mxu0 0.0
    %257 = vmatpush2.xpose.msra.mxu0 0.0
    %258 = vmatprep.subr.mxu0 0.0
    %259 = vmatpush2.xpose.msra.mxu0 0.0
    %260 = vmatprep.subr.mxu0 0.0
    %261 = vmatpush2.xpose.msra.mxu0 0.0
    %262 = vmatprep.subr.mxu0 0.0
    %263 = vmatpush2.xpose.msra.mxu0 0.0
    %264 = vmatprep.subr.mxu0 0.0
    %265 = vmatpush2.xpose.msra.mxu0 0.0
    %266 = vmatprep.subr.mxu0 0.0
    %267 = vmatpush2.xpose.msra.mxu0 0.0
    %268 = vmatprep.subr.mxu0 0.0
    %269 = vmatpush2.xpose.msra.mxu0 0.0
    %270 = vmatprep.subr.mxu0 0.0
    %271 = vmatpush2.xpose.msra.mxu0 0.0
    %272 = vmatprep.subr.mxu0 0.0
    %273 = vmatpush2.xpose.msra.mxu0 0.0
    %274 = vmatprep.subr.mxu0 0.0
    %275 = vmatpush2.xpose.msra.mxu0 0.0
    %276 = vmatprep.subr.mxu0 0.0
    %277 = vmatpush2.xpose.msra.mxu0 0.0
    %278 = vmatprep.subr.mxu0 0.0
    %279 = vmatpush2.xpose.msra.mxu0 0.0
    %280 = vmatprep.subr.mxu0 0.0
    %281 = vmatpush2.xpose.msra.mxu0 0.0
    %282 = vmatprep.subr.mxu0 0.0
    %283 = vmatpush2.xpose.msra.mxu0 0.0
    %284 = vmatprep.subr.mxu0 0.0
    %285 = vmatpush2.xpose.msra.mxu0 0.0
    %286 = vmatprep.mubr.f32.mxu0 0.0
    %287 = vmatmul.mubr.f32.gmra.mxu0 %v220
    %v288 = vpop.f32.mrf.mxu0
    %v289 = vadd.f32 0.0, %v288
    %v290 = vpop.f32.mrf.mxu0
    %291 = vdwg.mxu0
    %v292 = vmul.f32 %v216, 0.17677669
    %v293 = vmul.f32 %v289, 0.17677669
    %vm294 = vcmask 64512
    %v295 = vsel %vm294, %v292, -inf
    %296 = vmax.xlane.f32.xlu0 %v295
    %v297 = vpop.xlane.xlu0 %296
    %v298 = vsel %vm294, %v293, -inf
    %299 = vmax.xlane.f32.xlu0 %v298
    %v300 = vpop.xlane.xlu0 %299
    %v301 = vsub.f32 %v292, %v297
    %v302 = vsub.f32 %v293, %v300
    %v303 = vmul.f32 %v301, 1.442695
    %v304 = vpow.pop %v303
    %v305 = vmul.f32 %v302, 1.442695
    %v306 = vpow.pop %v305
    %v307 = vsel %vm294, %v304, 0.0
    %308 = vadd.xlane.f32.xlu0 %v307
    %v309 = vpop.xlane.xlu0 %308
    %v310 = vsel %vm294, %v306, 0.0
    %311 = vadd.xlane.f32.xlu0 %v310
    %v312 = vpop.xlane.xlu0 %311
    %v313 = vrcp.pop %v309
    %v314 = vrcp.pop %v312
    %v315 = vmul.f32 %v304, %v313
    %v316 = vmul.f32 %v306, %v314
    %v318 = vsel %vm294, %v315, 0
    %320 = vmatprep.subr.mxu0 0.0
    %321 = vmatpush1.msra.mxu0 0.0
    %322 = vmatprep.subr.mxu0 0.0
    %323 = vmatpush1.msra.mxu0 0.0
    %324 = vmatprep.subr.mxu0 0.0
    %325 = vmatpush1.msra.mxu0 0.0
    %326 = vmatprep.subr.mxu0 0.0
    %327 = vmatpush1.msra.mxu0 0.0
    %328 = vmatprep.subr.mxu0 0.0
    %329 = vmatpush1.msra.mxu0 0.0
    %330 = vmatprep.subr.mxu0 0.0
    %331 = vmatpush1.msra.mxu0 0.0
    %332 = vmatprep.subr.mxu0 0.0
    %333 = vmatpush1.msra.mxu0 0.0
    %334 = vmatprep.subr.mxu0 0.0
    %335 = vmatpush1.msra.mxu0 0.0
    %336 = vmatprep.subr.mxu0 0.0
    %337 = vmatpush1.msra.mxu0 0.0
    %338 = vmatprep.subr.mxu0 0.0
    %339 = vmatpush1.msra.mxu0 0.0
    %340 = vmatprep.subr.mxu0 0.0
    %341 = vmatpush1.msra.mxu0 0.0
    %342 = vmatprep.subr.mxu0 0.0
    %343 = vmatpush1.msra.mxu0 0.0
    %344 = vmatprep.subr.mxu0 0.0
    %345 = vmatpush1.msra.mxu0 0.0
    %346 = vmatprep.subr.mxu0 0.0
    %347 = vmatpush1.msra.mxu0 0.0
    %348 = vmatprep.subr.mxu0 0.0
    %349 = vmatpush1.msra.mxu0 0.0
    %350 = vmatprep.subr.mxu0 0.0
    %351 = vmatpush1.msra.mxu0 %v138
    %352 = vmatprep.subr.mxu0 0.0
    %353 = vmatpush2.msra.mxu0 0.0
    %354 = vmatprep.subr.mxu0 0.0
    %355 = vmatpush2.msra.mxu0 0.0
    %356 = vmatprep.subr.mxu0 0.0
    %357 = vmatpush2.msra.mxu0 0.0
    %358 = vmatprep.subr.mxu0 0.0
    %359 = vmatpush2.msra.mxu0 0.0
    %360 = vmatprep.subr.mxu0 0.0
    %361 = vmatpush2.msra.mxu0 0.0
    %362 = vmatprep.subr.mxu0 0.0
    %363 = vmatpush2.msra.mxu0 0.0
    %364 = vmatprep.subr.mxu0 0.0
    %365 = vmatpush2.msra.mxu0 0.0
    %366 = vmatprep.subr.mxu0 0.0
    %367 = vmatpush2.msra.mxu0 0.0
    %368 = vmatprep.subr.mxu0 0.0
    %369 = vmatpush2.msra.mxu0 0.0
    %370 = vmatprep.subr.mxu0 0.0
    %371 = vmatpush2.msra.mxu0 0.0
    %372 = vmatprep.subr.mxu0 0.0
    %373 = vmatpush2.msra.mxu0 0.0
    %374 = vmatprep.subr.mxu0 0.0
    %375 = vmatpush2.msra.mxu0 0.0
    %376 = vmatprep.subr.mxu0 0.0
    %377 = vmatpush2.msra.mxu0 0.0
    %378 = vmatprep.subr.mxu0 0.0
    %379 = vmatpush2.msra.mxu0 0.0
    %380 = vmatprep.subr.mxu0 0.0
    %381 = vmatpush2.msra.mxu0 0.0
    %382 = vmatprep.subr.mxu0 0.0
    %383 = vmatpush2.msra.mxu0 0.0
    %384 = vmatprep.mubr.f32.mxu0 0.0
    %385 = vmatmul.mubr.f32.gmra.mxu0 %v318
    %v386 = vpop.f32.mrf.mxu0
    %v387 = vadd.f32 0.0, %v386
    %v388 = vpop.f32.mrf.mxu0
    %389 = vdwg.mxu0
    %v391 = vsel %vm294, %v316, 0
    %393 = vmatprep.subr.mxu0 0.0
    %394 = vmatpush1.msra.mxu0 0.0
    %395 = vmatprep.subr.mxu0 0.0
    %396 = vmatpush1.msra.mxu0 0.0
    %397 = vmatprep.subr.mxu0 0.0
    %398 = vmatpush1.msra.mxu0 0.0
    %399 = vmatprep.subr.mxu0 0.0
    %400 = vmatpush1.msra.mxu0 0.0
    %401 = vmatprep.subr.mxu0 0.0
    %402 = vmatpush1.msra.mxu0 0.0
    %403 = vmatprep.subr.mxu0 0.0
    %404 = vmatpush1.msra.mxu0 0.0
    %405 = vmatprep.subr.mxu0 0.0
    %406 = vmatpush1.msra.mxu0 0.0
    %407 = vmatprep.subr.mxu0 0.0
    %408 = vmatpush1.msra.mxu0 0.0
    %409 = vmatprep.subr.mxu0 0.0
    %410 = vmatpush1.msra.mxu0 0.0
    %411 = vmatprep.subr.mxu0 0.0
    %412 = vmatpush1.msra.mxu0 0.0
    %413 = vmatprep.subr.mxu0 0.0
    %414 = vmatpush1.msra.mxu0 0.0
    %415 = vmatprep.subr.mxu0 0.0
    %416 = vmatpush1.msra.mxu0 0.0
    %417 = vmatprep.subr.mxu0 0.0
    %418 = vmatpush1.msra.mxu0 0.0
    %419 = vmatprep.subr.mxu0 0.0
    %420 = vmatpush1.msra.mxu0 0.0
    %421 = vmatprep.subr.mxu0 0.0
    %422 = vmatpush1.msra.mxu0 0.0
    %423 = vmatprep.subr.mxu0 0.0
    %424 = vmatpush1.msra.mxu0 %v143
    %425 = vmatprep.subr.mxu0 0.0
    %426 = vmatpush2.msra.mxu0 0.0
    %427 = vmatprep.subr.mxu0 0.0
    %428 = vmatpush2.msra.mxu0 0.0
    %429 = vmatprep.subr.mxu0 0.0
    %430 = vmatpush2.msra.mxu0 0.0
    %431 = vmatprep.subr.mxu0 0.0
    %432 = vmatpush2.msra.mxu0 0.0
    %433 = vmatprep.subr.mxu0 0.0
    %434 = vmatpush2.msra.mxu0 0.0
    %435 = vmatprep.subr.mxu0 0.0
    %436 = vmatpush2.msra.mxu0 0.0
    %437 = vmatprep.subr.mxu0 0.0
    %438 = vmatpush2.msra.mxu0 0.0
    %439 = vmatprep.subr.mxu0 0.0
    %440 = vmatpush2.msra.mxu0 0.0
    %441 = vmatprep.subr.mxu0 0.0
    %442 = vmatpush2.msra.mxu0 0.0
    %443 = vmatprep.subr.mxu0 0.0
    %444 = vmatpush2.msra.mxu0 0.0
    %445 = vmatprep.subr.mxu0 0.0
    %446 = vmatpush2.msra.mxu0 0.0
    %447 = vmatprep.subr.mxu0 0.0
    %448 = vmatpush2.msra.mxu0 0.0
    %449 = vmatprep.subr.mxu0 0.0
    %450 = vmatpush2.msra.mxu0 0.0
    %451 = vmatprep.subr.mxu0 0.0
    %452 = vmatpush2.msra.mxu0 0.0
    %453 = vmatprep.subr.mxu0 0.0
    %454 = vmatpush2.msra.mxu0 0.0
    %455 = vmatprep.subr.mxu0 0.0
    %456 = vmatpush2.msra.mxu0 0.0
    %457 = vmatprep.mubr.f32.mxu0 0.0
    %458 = vmatmul.mubr.f32.gmra.mxu0 %v391
    %v459 = vpop.f32.mrf.mxu0
    %v460 = vadd.f32 0.0, %v459
    %v461 = vpop.f32.mrf.mxu0
    %462 = vdwg.mxu0
    %v463 = vlaneseq
    %v464 = vshrl.u32 %v463, 7
    %v465 = vsub.s32 1, %v464
    %v466 = vrot.slane %v58, %v465
    %v468 = vsel %vm64, %v387, 0
    %v471 = vsel %vm64, %v460, 0
    %473 = vmatprep.subr.mxu0 0.0
    %474 = vmatpush1.msra.mxu0 0.0
    %475 = vmatprep.subr.mxu0 0.0
    %476 = vmatpush1.msra.mxu0 0.0
    %477 = vmatprep.subr.mxu0 0.0
    %478 = vmatpush1.msra.mxu0 0.0
    %479 = vmatprep.subr.mxu0 0.0
    %480 = vmatpush1.msra.mxu0 0.0
    %481 = vmatprep.subr.mxu0 0.0
    %482 = vmatpush1.msra.mxu0 0.0
    %483 = vmatprep.subr.mxu0 0.0
    %484 = vmatpush1.msra.mxu0 0.0
    %485 = vmatprep.subr.mxu0 0.0
    %486 = vmatpush1.msra.mxu0 0.0
    %487 = vmatprep.subr.mxu0 0.0
    %488 = vmatpush1.msra.mxu0 0.0
    %489 = vmatprep.subr.mxu0 0.0
    %490 = vmatpush1.msra.mxu0 0.0
    %491 = vmatprep.subr.mxu0 0.0
    %492 = vmatpush1.msra.mxu0 0.0
    %493 = vmatprep.subr.mxu0 0.0
    %494 = vmatpush1.msra.mxu0 0.0
    %495 = vmatprep.subr.mxu0 0.0
    %496 = vmatpush1.msra.mxu0 0.0
    %497 = vmatprep.subr.mxu0 0.0
    %498 = vmatpush1.msra.mxu0 %v45
    %499 = vmatprep.subr.mxu0 0.0
    %500 = vmatpush1.msra.mxu0 %v44
    %501 = vmatprep.subr.mxu0 0.0
    %502 = vmatpush1.msra.mxu0 %v43
    %503 = vmatprep.subr.mxu0 0.0
    %504 = vmatpush1.msra.mxu0 %v42
    %505 = vmatprep.subr.mxu0 0.0
    %506 = vmatpush2.msra.mxu0 0.0
    %507 = vmatprep.subr.mxu0 0.0
    %508 = vmatpush2.msra.mxu0 0.0
    %509 = vmatprep.subr.mxu0 0.0
    %510 = vmatpush2.msra.mxu0 0.0
    %511 = vmatprep.subr.mxu0 0.0
    %512 = vmatpush2.msra.mxu0 0.0
    %513 = vmatprep.subr.mxu0 0.0
    %514 = vmatpush2.msra.mxu0 0.0
    %515 = vmatprep.subr.mxu0 0.0
    %516 = vmatpush2.msra.mxu0 0.0
    %517 = vmatprep.subr.mxu0 0.0
    %518 = vmatpush2.msra.mxu0 0.0
    %519 = vmatprep.subr.mxu0 0.0
    %520 = vmatpush2.msra.mxu0 0.0
    %521 = vmatprep.subr.mxu0 0.0
    %522 = vmatpush2.msra.mxu0 0.0
    %523 = vmatprep.subr.mxu0 0.0
    %524 = vmatpush2.msra.mxu0 0.0
    %525 = vmatprep.subr.mxu0 0.0
    %526 = vmatpush2.msra.mxu0 0.0
    %527 = vmatprep.subr.mxu0 0.0
    %528 = vmatpush2.msra.mxu0 0.0
    %529 = vmatprep.subr.mxu0 0.0
    %530 = vmatpush2.msra.mxu0 0.0
    %531 = vmatprep.subr.mxu0 0.0
    %532 = vmatpush2.msra.mxu0 0.0
    %533 = vmatprep.subr.mxu0 0.0
    %534 = vmatpush2.msra.mxu0 0.0
    %535 = vmatprep.subr.mxu0 0.0
    %536 = vmatpush2.msra.mxu0 0.0
    %537 = vmatprep.mubr.f32.mxu0 0.0
    %538 = vmatmul.mubr.f32.gmra.mxu0 %v468
    %v539 = vpop.f32.mrf.mxu0
    %v540 = vadd.f32 %v466, %v539
    %v541 = vpop.f32.mrf.mxu0
    %542 = vmatprep.mubr.f32.mxu0 0.0
    %543 = vmatmul.mubr.f32.gmra.mxu0 %v471
    %v544 = vpop.f32.mrf.mxu0
    %v545 = vadd.f32 %v466, %v544
    %v546 = vpop.f32.mrf.mxu0
    %547 = vdwg.mxu0
    %v548 = vadd.f32 %v36, %v540
    %v549 = vadd.f32 %v37, %v545
    %v550 = vsel %vm64, %v548, 0.0
    %551 = vadd.xlane.f32.xlu0 %v550
    %v552 = vpop.xlane.xlu0 %551
    %v553 = vsel %vm64, %v549, 0.0
    %554 = vadd.xlane.f32.xlu0 %v553
    %v555 = vpop.xlane.xlu0 %554
    %v556 = vrcp.pop 32.0
    %v557 = vmul.f32 %v552, %v556
    %v558 = vmul.f32 %v555, %v556
    %v559 = vsub.f32 %v548, %v557
    %v560 = vsub.f32 %v549, %v558
    %v561 = vmul.f32 %v559, %v559
    %v562 = vmul.f32 %v560, %v560
    %v563 = vsel %vm64, %v561, 0.0
    %564 = vadd.xlane.f32.xlu0 %v563
    %v565 = vpop.xlane.xlu0 %564
    %v566 = vsel %vm64, %v562, 0.0
    %567 = vadd.xlane.f32.xlu0 %v566
    %v568 = vpop.xlane.xlu0 %567
    %v569 = vmul.f32 %v565, %v556
    %v570 = vmul.f32 %v568, %v556
    %v571 = vadd.f32 %v569, 1e-05
    %v572 = vadd.f32 %v570, 1e-05
    %v573 = vrsqrt.pop %v571
    %v574 = vrsqrt.pop %v572
    %v575 = vmul.f32 %v559, %v573
    %v576 = vmul.f32 %v560, %v574
    %v577 = vlaneseq
    %v578 = vshrl.u32 %v577, 7
    %v579 = vsub.s32 3, %v578
    %v580 = vrot.slane %v58, %v579
    %v581 = vmul.f32 %v575, %v580
    %v582 = vmul.f32 %v576, %v580
    %v583 = vlaneseq
    %v584 = vshrl.u32 %v583, 7
    %v585 = vsub.s32 4, %v584
    %v586 = vrot.slane %v58, %v585
    %v587 = vadd.f32 %v581, %v586
    %v588 = vadd.f32 %v582, %v586
    %v590 = vlaneseq
    %v591 = vshrl.u32 %v590, 7
    %v592 = vsub.s32 0, %v591
    %v593 = vrot.slane %v59, %v592
    %v596 = vsel %vm64, %v587, 0
    %v599 = vsel %vm64, %v588, 0
    %601 = vmatprep.subr.mxu0 0.0
    %602 = vmatpush1.msra.mxu0 0.0
    %603 = vmatprep.subr.mxu0 0.0
    %604 = vmatpush1.msra.mxu0 0.0
    %605 = vmatprep.subr.mxu0 0.0
    %606 = vmatpush1.msra.mxu0 0.0
    %607 = vmatprep.subr.mxu0 0.0
    %608 = vmatpush1.msra.mxu0 0.0
    %609 = vmatprep.subr.mxu0 0.0
    %610 = vmatpush1.msra.mxu0 0.0
    %611 = vmatprep.subr.mxu0 0.0
    %612 = vmatpush1.msra.mxu0 0.0
    %613 = vmatprep.subr.mxu0 0.0
    %614 = vmatpush1.msra.mxu0 0.0
    %615 = vmatprep.subr.mxu0 0.0
    %616 = vmatpush1.msra.mxu0 0.0
    %617 = vmatprep.subr.mxu0 0.0
    %618 = vmatpush1.msra.mxu0 0.0
    %619 = vmatprep.subr.mxu0 0.0
    %620 = vmatpush1.msra.mxu0 0.0
    %621 = vmatprep.subr.mxu0 0.0
    %622 = vmatpush1.msra.mxu0 0.0
    %623 = vmatprep.subr.mxu0 0.0
    %624 = vmatpush1.msra.mxu0 0.0
    %625 = vmatprep.subr.mxu0 0.0
    %626 = vmatpush1.msra.mxu0 %v49
    %627 = vmatprep.subr.mxu0 0.0
    %628 = vmatpush1.msra.mxu0 %v48
    %629 = vmatprep.subr.mxu0 0.0
    %630 = vmatpush1.msra.mxu0 %v47
    %631 = vmatprep.subr.mxu0 0.0
    %632 = vmatpush1.msra.mxu0 %v46
    %633 = vmatprep.subr.mxu0 0.0
    %634 = vmatpush2.msra.mxu0 0.0
    %635 = vmatprep.subr.mxu0 0.0
    %636 = vmatpush2.msra.mxu0 0.0
    %637 = vmatprep.subr.mxu0 0.0
    %638 = vmatpush2.msra.mxu0 0.0
    %639 = vmatprep.subr.mxu0 0.0
    %640 = vmatpush2.msra.mxu0 0.0
    %641 = vmatprep.subr.mxu0 0.0
    %642 = vmatpush2.msra.mxu0 0.0
    %643 = vmatprep.subr.mxu0 0.0
    %644 = vmatpush2.msra.mxu0 0.0
    %645 = vmatprep.subr.mxu0 0.0
    %646 = vmatpush2.msra.mxu0 0.0
    %647 = vmatprep.subr.mxu0 0.0
    %648 = vmatpush2.msra.mxu0 0.0
    %649 = vmatprep.subr.mxu0 0.0
    %650 = vmatpush2.msra.mxu0 0.0
    %651 = vmatprep.subr.mxu0 0.0
    %652 = vmatpush2.msra.mxu0 0.0
    %653 = vmatprep.subr.mxu0 0.0
    %654 = vmatpush2.msra.mxu0 0.0
    %655 = vmatprep.subr.mxu0 0.0
    %656 = vmatpush2.msra.mxu0 0.0
    %657 = vmatprep.subr.mxu0 0.0
    %658 = vmatpush2.msra.mxu0 0.0
    %659 = vmatprep.subr.mxu0 0.0
    %660 = vmatpush2.msra.mxu0 0.0
    %661 = vmatprep.subr.mxu0 0.0
    %662 = vmatpush2.msra.mxu0 0.0
    %663 = vmatprep.subr.mxu0 0.0
    %664 = vmatpush2.msra.mxu0 0.0
    %665 = vmatprep.mubr.f32.mxu0 0.0
    %666 = vmatmul.mubr.f32.gmra.mxu0 %v596
    %v667 = vpop.f32.mrf.mxu0
    %v668 = vadd.f32 %v593, %v667
    %v669 = vpop.f32.mrf.mxu0
    %670 = vmatprep.mubr.f32.mxu0 0.0
    %671 = vmatmul.mubr.f32.gmra.mxu0 %v599
    %v672 = vpop.f32.mrf.mxu0
    %v673 = vadd.f32 %v593, %v672
    %v674 = vpop.f32.mrf.mxu0
    %675 = vdwg.mxu0
    %v676 = vmax.f32 %v668, 0.0
    %v677 = vmax.f32 %v673, 0.0
    %v678 = vlaneseq
    %v679 = vshrl.u32 %v678, 7
    %v680 = vsub.s32 2, %v679
    %v681 = vrot.slane %v58, %v680
    %vm682 = vcmask 523264
    %v684 = vsel %vm682, %v676, 0
    %v687 = vsel %vm682, %v677, 0
    %689 = vmatprep.subr.mxu0 0.0
    %690 = vmatpush1.msra.mxu0 0.0
    %691 = vmatprep.subr.mxu0 0.0
    %692 = vmatpush1.msra.mxu0 0.0
    %693 = vmatprep.subr.mxu0 0.0
    %694 = vmatpush1.msra.mxu0 0.0
    %695 = vmatprep.subr.mxu0 0.0
    %696 = vmatpush1.msra.mxu0 0.0
    %697 = vmatprep.subr.mxu0 0.0
    %698 = vmatpush1.msra.mxu0 0.0
    %699 = vmatprep.subr.mxu0 0.0
    %700 = vmatpush1.msra.mxu0 0.0
    %701 = vmatprep.subr.mxu0 0.0
    %702 = vmatpush1.msra.mxu0 0.0
    %703 = vmatprep.subr.mxu0 0.0
    %704 = vmatpush1.msra.mxu0 0.0
    %705 = vmatprep.subr.mxu0 0.0
    %706 = vmatpush1.msra.mxu0 %v57
    %707 = vmatprep.subr.mxu0 0.0
    %708 = vmatpush1.msra.mxu0 %v56
    %709 = vmatprep.subr.mxu0 0.0
    %710 = vmatpush1.msra.mxu0 %v55
    %711 = vmatprep.subr.mxu0 0.0
    %712 = vmatpush1.msra.mxu0 %v54
    %713 = vmatprep.subr.mxu0 0.0
    %714 = vmatpush1.msra.mxu0 %v53
    %715 = vmatprep.subr.mxu0 0.0
    %716 = vmatpush1.msra.mxu0 %v52
    %717 = vmatprep.subr.mxu0 0.0
    %718 = vmatpush1.msra.mxu0 %v51
    %719 = vmatprep.subr.mxu0 0.0
    %720 = vmatpush1.msra.mxu0 %v50
    %721 = vmatprep.subr.mxu0 0.0
    %722 = vmatpush2.msra.mxu0 0.0
    %723 = vmatprep.subr.mxu0 0.0
    %724 = vmatpush2.msra.mxu0 0.0
    %725 = vmatprep.subr.mxu0 0.0
    %726 = vmatpush2.msra.mxu0 0.0
    %727 = vmatprep.subr.mxu0 0.0
    %728 = vmatpush2.msra.mxu0 0.0
    %729 = vmatprep.subr.mxu0 0.0
    %730 = vmatpush2.msra.mxu0 0.0
    %731 = vmatprep.subr.mxu0 0.0
    %732 = vmatpush2.msra.mxu0 0.0
    %733 = vmatprep.subr.mxu0 0.0
    %734 = vmatpush2.msra.mxu0 0.0
    %735 = vmatprep.subr.mxu0 0.0
    %736 = vmatpush2.msra.mxu0 0.0
    %737 = vmatprep.subr.mxu0 0.0
    %738 = vmatpush2.msra.mxu0 0.0
    %739 = vmatprep.subr.mxu0 0.0
    %740 = vmatpush2.msra.mxu0 0.0
    %741 = vmatprep.subr.mxu0 0.0
    %742 = vmatpush2.msra.mxu0 0.0
    %743 = vmatprep.subr.mxu0 0.0
    %744 = vmatpush2.msra.mxu0 0.0
    %745 = vmatprep.subr.mxu0 0.0
    %746 = vmatpush2.msra.mxu0 0.0
    %747 = vmatprep.subr.mxu0 0.0
    %748 = vmatpush2.msra.mxu0 0.0
    %749 = vmatprep.subr.mxu0 0.0
    %750 = vmatpush2.msra.mxu0 0.0
    %751 = vmatprep.subr.mxu0 0.0
    %752 = vmatpush2.msra.mxu0 0.0
    %753 = vmatprep.mubr.f32.mxu0 0.0
    %754 = vmatmul.mubr.f32.gmra.mxu0 %v684
    %v755 = vpop.f32.mrf.mxu0
    %v756 = vadd.f32 %v681, %v755
    %v757 = vpop.f32.mrf.mxu0
    %758 = vmatprep.mubr.f32.mxu0 0.0
    %759 = vmatmul.mubr.f32.gmra.mxu0 %v687
    %v760 = vpop.f32.mrf.mxu0
    %v761 = vadd.f32 %v681, %v760
    %v762 = vpop.f32.mrf.mxu0
    %763 = vdwg.mxu0
    %v764 = vadd.f32 %v587, %v756
    %v765 = vadd.f32 %v588, %v761
    %v766 = vsel %vm64, %v764, 0.0
    %767 = vadd.xlane.f32.xlu0 %v766
    %v768 = vpop.xlane.xlu0 %767
    %v769 = vsel %vm64, %v765, 0.0
    %770 = vadd.xlane.f32.xlu0 %v769
    %v771 = vpop.xlane.xlu0 %770
    %v772 = vmul.f32 %v768, %v556
    %v773 = vmul.f32 %v771, %v556
    %v774 = vsub.f32 %v764, %v772
    %v775 = vsub.f32 %v765, %v773
    %v776 = vmul.f32 %v774, %v774
    %v777 = vmul.f32 %v775, %v775
    %v778 = vsel %vm64, %v776, 0.0
    %779 = vadd.xlane.f32.xlu0 %v778
    %v780 = vpop.xlane.xlu0 %779
    %v781 = vsel %vm64, %v777, 0.0
    %782 = vadd.xlane.f32.xlu0 %v781
    %v783 = vpop.xlane.xlu0 %782
    %v784 = vmul.f32 %v780, %v556
    %v785 = vmul.f32 %v783, %v556
    %v786 = vadd.f32 %v784, 1e-05
    %v787 = vadd.f32 %v785, 1e-05
    %v788 = vrsqrt.pop %v786
    %v789 = vrsqrt.pop %v787
    %v790 = vmul.f32 %v774, %v788
    %v791 = vmul.f32 %v775, %v789
    %v792 = vlaneseq
    %v793 = vshrl.u32 %v792, 7
    %v794 = vsub.s32 5, %v793
    %v795 = vrot.slane %v58, %v794
    %v796 = vmul.f32 %v790, %v795
    %v797 = vmul.f32 %v791, %v795
    %v798 = vlaneseq
    %v799 = vshrl.u32 %v798, 7
    %v800 = vsub.s32 6, %v799
    %v801 = vrot.slane %v58, %v800
    %v802 = vadd.f32 %v796, %v801
    %v803 = vadd.f32 %v797, %v801
    %s804 = scalar_lea.vmem %s2, 32
    %v805 = vld [vmem:[%s804] sm:$0xff]
    %v806 = vld [vmem:[%s804 + $0x8] sm:$0xff]
    %v807 = vld [vmem:[%s804 + $0x10] sm:$0xff]
    %v808 = vld [vmem:[%s804 + $0x18] sm:$0xff]
    %s809 = scalar_lea.vmem %s3, 32
    %v810 = vld [vmem:[%s809] sm:$0xff]
    %v811 = vld [vmem:[%s809 + $0x8] sm:$0xff]
    %v812 = vld [vmem:[%s809 + $0x10] sm:$0xff]
    %v813 = vld [vmem:[%s809 + $0x18] sm:$0xff]
    %s814 = scalar_lea.vmem %s4, 32
    %v815 = vld [vmem:[%s814] sm:$0xff]
    %v816 = vld [vmem:[%s814 + $0x8] sm:$0xff]
    %v817 = vld [vmem:[%s814 + $0x10] sm:$0xff]
    %v818 = vld [vmem:[%s814 + $0x18] sm:$0xff]
    %s819 = scalar_lea.vmem %s5, 64
    %v820 = vld [vmem:[%s819] sm:$0xff]
    %v821 = vld [vmem:[%s819 + $0x8] sm:$0xff]
    %v822 = vld [vmem:[%s819 + $0x10] sm:$0xff]
    %v823 = vld [vmem:[%s819 + $0x18] sm:$0xff]
    %v824 = vld [vmem:[%s819 + $0x20] sm:$0xff]
    %v825 = vld [vmem:[%s819 + $0x28] sm:$0xff]
    %v826 = vld [vmem:[%s819 + $0x30] sm:$0xff]
    %v827 = vld [vmem:[%s819 + $0x38] sm:$0xff]
    %s828 = scalar_lea.vmem %s6, 8
    %v829 = vld [vmem:[%s828] sm:$0x7f]
    %s830 = scalar_lea.vmem %s7, 1
    %v831 = vld [vmem:[%s830] sm:$0x1]
    %v832 = vlaneseq
    %v833 = vshrl.u32 %v832, 7
    %v834 = vsub.s32 0, %v833
    %v835 = vrot.slane %v829, %v834
    %v837 = vsel %vm64, %v802, 0
    %v840 = vsel %vm64, %v803, 0
    %842 = vmatprep.subr.mxu0 0.0
    %843 = vmatpush1.msra.mxu0 0.0
    %844 = vmatprep.subr.mxu0 0.0
    %845 = vmatpush1.msra.mxu0 0.0
    %846 = vmatprep.subr.mxu0 0.0
    %847 = vmatpush1.msra.mxu0 0.0
    %848 = vmatprep.subr.mxu0 0.0
    %849 = vmatpush1.msra.mxu0 0.0
    %850 = vmatprep.subr.mxu0 0.0
    %851 = vmatpush1.msra.mxu0 0.0
    %852 = vmatprep.subr.mxu0 0.0
    %853 = vmatpush1.msra.mxu0 0.0
    %854 = vmatprep.subr.mxu0 0.0
    %855 = vmatpush1.msra.mxu0 0.0
    %856 = vmatprep.subr.mxu0 0.0
    %857 = vmatpush1.msra.mxu0 0.0
    %858 = vmatprep.subr.mxu0 0.0
    %859 = vmatpush1.msra.mxu0 0.0
    %860 = vmatprep.subr.mxu0 0.0
    %861 = vmatpush1.msra.mxu0 0.0
    %862 = vmatprep.subr.mxu0 0.0
    %863 = vmatpush1.msra.mxu0 0.0
    %864 = vmatprep.subr.mxu0 0.0
    %865 = vmatpush1.msra.mxu0 0.0
    %866 = vmatprep.subr.mxu0 0.0
    %867 = vmatpush1.msra.mxu0 %v808
    %868 = vmatprep.subr.mxu0 0.0
    %869 = vmatpush1.msra.mxu0 %v807
    %870 = vmatprep.subr.mxu0 0.0
    %871 = vmatpush1.msra.mxu0 %v806
    %872 = vmatprep.subr.mxu0 0.0
    %873 = vmatpush1.msra.mxu0 %v805
    %874 = vmatprep.subr.mxu0 0.0
    %875 = vmatpush2.msra.mxu0 0.0
    %876 = vmatprep.subr.mxu0 0.0
    %877 = vmatpush2.msra.mxu0 0.0
    %878 = vmatprep.subr.mxu0 0.0
    %879 = vmatpush2.msra.mxu0 0.0
    %880 = vmatprep.subr.mxu0 0.0
    %881 = vmatpush2.msra.mxu0 0.0
    %882 = vmatprep.subr.mxu0 0.0
    %883 = vmatpush2.msra.mxu0 0.0
    %884 = vmatprep.subr.mxu0 0.0
    %885 = vmatpush2.msra.mxu0 0.0
    %886 = vmatprep.subr.mxu0 0.0
    %887 = vmatpush2.msra.mxu0 0.0
    %888 = vmatprep.subr.mxu0 0.0
    %889 = vmatpush2.msra.mxu0 0.0
    %890 = vmatprep.subr.mxu0 0.0
    %891 = vmatpush2.msra.mxu0 0.0
    %892 = vmatprep.subr.mxu0 0.0
    %893 = vmatpush2.msra.mxu0 0.0
    %894 = vmatprep.subr.mxu0 0.0
    %895 = vmatpush2.msra.mxu0 0.0
    %896 = vmatprep.subr.mxu0 0.0
    %897 = vmatpush2.msra.mxu0 0.0
    %898 = vmatprep.subr.mxu0 0.0
    %899 = vmatpush2.msra.mxu0 0.0
    %900 = vmatprep.subr.mxu0 0.0
    %901 = vmatpush2.msra.mxu0 0.0
    %902 = vmatprep.subr.mxu0 0.0
    %903 = vmatpush2.msra.mxu0 0.0
    %904 = vmatprep.subr.mxu0 0.0
    %905 = vmatpush2.msra.mxu0 0.0
    %906 = vmatprep.mubr.f32.mxu0 0.0
    %907 = vmatmul.mubr.f32.gmra.mxu0 %v837
    %v908 = vpop.f32.mrf.mxu0
    %v909 = vadd.f32 %v835, %v908
    %v910 = vpop.f32.mrf.mxu0
    %911 = vmatprep.mubr.f32.mxu0 0.0
    %912 = vmatmul.mubr.f32.gmra.mxu0 %v840
    %v913 = vpop.f32.mrf.mxu0
    %v914 = vadd.f32 %v835, %v913
    %v915 = vpop.f32.mrf.mxu0
    %916 = vdwg.mxu0
    %v918 = vsel %vm64, %v909, 0
    %920 = vmatprep.subr.mxu0 0.0
    %921 = vmatpush1.xpose.msra.mxu0 0.0
    %922 = vmatprep.subr.mxu0 0.0
    %923 = vmatpush1.xpose.msra.mxu0 0.0
    %924 = vmatprep.subr.mxu0 0.0
    %925 = vmatpush1.xpose.msra.mxu0 0.0
    %926 = vmatprep.subr.mxu0 0.0
    %927 = vmatpush1.xpose.msra.mxu0 0.0
    %928 = vmatprep.subr.mxu0 0.0
    %929 = vmatpush1.xpose.msra.mxu0 0.0
    %930 = vmatprep.subr.mxu0 0.0
    %931 = vmatpush1.xpose.msra.mxu0 0.0
    %932 = vmatprep.subr.mxu0 0.0
    %933 = vmatpush1.xpose.msra.mxu0 0.0
    %934 = vmatprep.subr.mxu0 0.0
    %935 = vmatpush1.xpose.msra.mxu0 0.0
    %936 = vmatprep.subr.mxu0 0.0
    %937 = vmatpush1.xpose.msra.mxu0 0.0
    %938 = vmatprep.subr.mxu0 0.0
    %939 = vmatpush1.xpose.msra.mxu0 0.0
    %940 = vmatprep.subr.mxu0 0.0
    %941 = vmatpush1.xpose.msra.mxu0 0.0
    %942 = vmatprep.subr.mxu0 0.0
    %943 = vmatpush1.xpose.msra.mxu0 0.0
    %944 = vmatprep.subr.mxu0 0.0
    %945 = vmatpush1.xpose.msra.mxu0 0.0
    %946 = vmatprep.subr.mxu0 0.0
    %947 = vmatpush1.xpose.msra.mxu0 0.0
    %948 = vmatprep.subr.mxu0 0.0
    %949 = vmatpush1.xpose.msra.mxu0 0.0
    %950 = vmatprep.subr.mxu0 0.0
    %951 = vmatpush1.xpose.msra.mxu0 %v918
    %952 = vmatprep.subr.mxu0 0.0
    %953 = vmatpush2.xpose.msra.mxu0 0.0
    %954 = vmatprep.subr.mxu0 0.0
    %955 = vmatpush2.xpose.msra.mxu0 0.0
    %956 = vmatprep.subr.mxu0 0.0
    %957 = vmatpush2.xpose.msra.mxu0 0.0
    %958 = vmatprep.subr.mxu0 0.0
    %959 = vmatpush2.xpose.msra.mxu0 0.0
    %960 = vmatprep.subr.mxu0 0.0
    %961 = vmatpush2.xpose.msra.mxu0 0.0
    %962 = vmatprep.subr.mxu0 0.0
    %963 = vmatpush2.xpose.msra.mxu0 0.0
    %964 = vmatprep.subr.mxu0 0.0
    %965 = vmatpush2.xpose.msra.mxu0 0.0
    %966 = vmatprep.subr.mxu0 0.0
    %967 = vmatpush2.xpose.msra.mxu0 0.0
    %968 = vmatprep.subr.mxu0 0.0
    %969 = vmatpush2.xpose.msra.mxu0 0.0
    %970 = vmatprep.subr.mxu0 0.0
    %971 = vmatpush2.xpose.msra.mxu0 0.0
    %972 = vmatprep.subr.mxu0 0.0
    %973 = vmatpush2.xpose.msra.mxu0 0.0
    %974 = vmatprep.subr.mxu0 0.0
    %975 = vmatpush2.xpose.msra.mxu0 0.0
    %976 = vmatprep.subr.mxu0 0.0
    %977 = vmatpush2.xpose.msra.mxu0 0.0
    %978 = vmatprep.subr.mxu0 0.0
    %979 = vmatpush2.xpose.msra.mxu0 0.0
    %980 = vmatprep.subr.mxu0 0.0
    %981 = vmatpush2.xpose.msra.mxu0 0.0
    %982 = vmatprep.subr.mxu0 0.0
    %983 = vmatpush2.xpose.msra.mxu0 0.0
    %984 = vmatprep.mubr.f32.mxu0 0.0
    %985 = vmatmul.mubr.f32.gmra.mxu0 %v918
    %v986 = vpop.f32.mrf.mxu0
    %v987 = vadd.f32 0.0, %v986
    %v988 = vpop.f32.mrf.mxu0
    %989 = vdwg.mxu0
    %v991 = vsel %vm64, %v914, 0
    %993 = vmatprep.subr.mxu0 0.0
    %994 = vmatpush1.xpose.msra.mxu0 0.0
    %995 = vmatprep.subr.mxu0 0.0
    %996 = vmatpush1.xpose.msra.mxu0 0.0
    %997 = vmatprep.subr.mxu0 0.0
    %998 = vmatpush1.xpose.msra.mxu0 0.0
    %999 = vmatprep.subr.mxu0 0.0
    %1000 = vmatpush1.xpose.msra.mxu0 0.0
    %1001 = vmatprep.subr.mxu0 0.0
    %1002 = vmatpush1.xpose.msra.mxu0 0.0
    %1003 = vmatprep.subr.mxu0 0.0
    %1004 = vmatpush1.xpose.msra.mxu0 0.0
    %1005 = vmatprep.subr.mxu0 0.0
    %1006 = vmatpush1.xpose.msra.mxu0 0.0
    %1007 = vmatprep.subr.mxu0 0.0
    %1008 = vmatpush1.xpose.msra.mxu0 0.0
    %1009 = vmatprep.subr.mxu0 0.0
    %1010 = vmatpush1.xpose.msra.mxu0 0.0
    %1011 = vmatprep.subr.mxu0 0.0
    %1012 = vmatpush1.xpose.msra.mxu0 0.0
    %1013 = vmatprep.subr.mxu0 0.0
    %1014 = vmatpush1.xpose.msra.mxu0 0.0
    %1015 = vmatprep.subr.mxu0 0.0
    %1016 = vmatpush1.xpose.msra.mxu0 0.0
    %1017 = vmatprep.subr.mxu0 0.0
    %1018 = vmatpush1.xpose.msra.mxu0 0.0
    %1019 = vmatprep.subr.mxu0 0.0
    %1020 = vmatpush1.xpose.msra.mxu0 0.0
    %1021 = vmatprep.subr.mxu0 0.0
    %1022 = vmatpush1.xpose.msra.mxu0 0.0
    %1023 = vmatprep.subr.mxu0 0.0
    %1024 = vmatpush1.xpose.msra.mxu0 %v991
    %1025 = vmatprep.subr.mxu0 0.0
    %1026 = vmatpush2.xpose.msra.mxu0 0.0
    %1027 = vmatprep.subr.mxu0 0.0
    %1028 = vmatpush2.xpose.msra.mxu0 0.0
    %1029 = vmatprep.subr.mxu0 0.0
    %1030 = vmatpush2.xpose.msra.mxu0 0.0
    %1031 = vmatprep.subr.mxu0 0.0
    %1032 = vmatpush2.xpose.msra.mxu0 0.0
    %1033 = vmatprep.subr.mxu0 0.0
    %1034 = vmatpush2.xpose.msra.mxu0 0.0
    %1035 = vmatprep.subr.mxu0 0.0
    %1036 = vmatpush2.xpose.msra.mxu0 0.0
    %1037 = vmatprep.subr.mxu0 0.0
    %1038 = vmatpush2.xpose.msra.mxu0 0.0
    %1039 = vmatprep.subr.mxu0 0.0
    %1040 = vmatpush2.xpose.msra.mxu0 0.0
    %1041 = vmatprep.subr.mxu0 0.0
    %1042 = vmatpush2.xpose.msra.mxu0 0.0
    %1043 = vmatprep.subr.mxu0 0.0
    %1044 = vmatpush2.xpose.msra.mxu0 0.0
    %1045 = vmatprep.subr.mxu0 0.0
    %1046 = vmatpush2.xpose.msra.mxu0 0.0
    %1047 = vmatprep.subr.mxu0 0.0
    %1048 = vmatpush2.xpose.msra.mxu0 0.0
    %1049 = vmatprep.subr.mxu0 0.0
    %1050 = vmatpush2.xpose.msra.mxu0 0.0
    %1051 = vmatprep.subr.mxu0 0.0
    %1052 = vmatpush2.xpose.msra.mxu0 0.0
    %1053 = vmatprep.subr.mxu0 0.0
    %1054 = vmatpush2.xpose.msra.mxu0 0.0
    %1055 = vmatprep.subr.mxu0 0.0
    %1056 = vmatpush2.xpose.msra.mxu0 0.0
    %1057 = vmatprep.mubr.f32.mxu0 0.0
    %1058 = vmatmul.mubr.f32.gmra.mxu0 %v991
    %v1059 = vpop.f32.mrf.mxu0
    %v1060 = vadd.f32 0.0, %v1059
    %v1061 = vpop.f32.mrf.mxu0
    %1062 = vdwg.mxu0
    %v1063 = vmul.f32 %v987, 0.17677669
    %v1064 = vmul.f32 %v1060, 0.17677669
    %v1065 = vsel %vm294, %v1063, -inf
    %1066 = vmax.xlane.f32.xlu0 %v1065
    %v1067 = vpop.xlane.xlu0 %1066
    %v1068 = vsel %vm294, %v1064, -inf
    %1069 = vmax.xlane.f32.xlu0 %v1068
    %v1070 = vpop.xlane.xlu0 %1069
    %v1071 = vsub.f32 %v1063, %v1067
    %v1072 = vsub.f32 %v1064, %v1070
    %v1073 = vmul.f32 %v1071, 1.442695
    %v1074 = vpow.pop %v1073
    %v1075 = vmul.f32 %v1072, 1.442695
    %v1076 = vpow.pop %v1075
    %v1077 = vsel %vm294, %v1074, 0.0
    %1078 = vadd.xlane.f32.xlu0 %v1077
    %v1079 = vpop.xlane.xlu0 %1078
    %v1080 = vsel %vm294, %v1076, 0.0
    %1081 = vadd.xlane.f32.xlu0 %v1080
    %v1082 = vpop.xlane.xlu0 %1081
    %v1083 = vrcp.pop %v1079
    %v1084 = vrcp.pop %v1082
    %v1085 = vmul.f32 %v1074, %v1083
    %v1086 = vmul.f32 %v1076, %v1084
    %v1088 = vsel %vm294, %v1085, 0
    %1090 = vmatprep.subr.mxu0 0.0
    %1091 = vmatpush1.msra.mxu0 0.0
    %1092 = vmatprep.subr.mxu0 0.0
    %1093 = vmatpush1.msra.mxu0 0.0
    %1094 = vmatprep.subr.mxu0 0.0
    %1095 = vmatpush1.msra.mxu0 0.0
    %1096 = vmatprep.subr.mxu0 0.0
    %1097 = vmatpush1.msra.mxu0 0.0
    %1098 = vmatprep.subr.mxu0 0.0
    %1099 = vmatpush1.msra.mxu0 0.0
    %1100 = vmatprep.subr.mxu0 0.0
    %1101 = vmatpush1.msra.mxu0 0.0
    %1102 = vmatprep.subr.mxu0 0.0
    %1103 = vmatpush1.msra.mxu0 0.0
    %1104 = vmatprep.subr.mxu0 0.0
    %1105 = vmatpush1.msra.mxu0 0.0
    %1106 = vmatprep.subr.mxu0 0.0
    %1107 = vmatpush1.msra.mxu0 0.0
    %1108 = vmatprep.subr.mxu0 0.0
    %1109 = vmatpush1.msra.mxu0 0.0
    %1110 = vmatprep.subr.mxu0 0.0
    %1111 = vmatpush1.msra.mxu0 0.0
    %1112 = vmatprep.subr.mxu0 0.0
    %1113 = vmatpush1.msra.mxu0 0.0
    %1114 = vmatprep.subr.mxu0 0.0
    %1115 = vmatpush1.msra.mxu0 0.0
    %1116 = vmatprep.subr.mxu0 0.0
    %1117 = vmatpush1.msra.mxu0 0.0
    %1118 = vmatprep.subr.mxu0 0.0
    %1119 = vmatpush1.msra.mxu0 0.0
    %1120 = vmatprep.subr.mxu0 0.0
    %1121 = vmatpush1.msra.mxu0 %v909
    %1122 = vmatprep.subr.mxu0 0.0
    %1123 = vmatpush2.msra.mxu0 0.0
    %1124 = vmatprep.subr.mxu0 0.0
    %1125 = vmatpush2.msra.mxu0 0.0
    %1126 = vmatprep.subr.mxu0 0.0
    %1127 = vmatpush2.msra.mxu0 0.0
    %1128 = vmatprep.subr.mxu0 0.0
    %1129 = vmatpush2.msra.mxu0 0.0
    %1130 = vmatprep.subr.mxu0 0.0
    %1131 = vmatpush2.msra.mxu0 0.0
    %1132 = vmatprep.subr.mxu0 0.0
    %1133 = vmatpush2.msra.mxu0 0.0
    %1134 = vmatprep.subr.mxu0 0.0
    %1135 = vmatpush2.msra.mxu0 0.0
    %1136 = vmatprep.subr.mxu0 0.0
    %1137 = vmatpush2.msra.mxu0 0.0
    %1138 = vmatprep.subr.mxu0 0.0
    %1139 = vmatpush2.msra.mxu0 0.0
    %1140 = vmatprep.subr.mxu0 0.0
    %1141 = vmatpush2.msra.mxu0 0.0
    %1142 = vmatprep.subr.mxu0 0.0
    %1143 = vmatpush2.msra.mxu0 0.0
    %1144 = vmatprep.subr.mxu0 0.0
    %1145 = vmatpush2.msra.mxu0 0.0
    %1146 = vmatprep.subr.mxu0 0.0
    %1147 = vmatpush2.msra.mxu0 0.0
    %1148 = vmatprep.subr.mxu0 0.0
    %1149 = vmatpush2.msra.mxu0 0.0
    %1150 = vmatprep.subr.mxu0 0.0
    %1151 = vmatpush2.msra.mxu0 0.0
    %1152 = vmatprep.subr.mxu0 0.0
    %1153 = vmatpush2.msra.mxu0 0.0
    %1154 = vmatprep.mubr.f32.mxu0 0.0
    %1155 = vmatmul.mubr.f32.gmra.mxu0 %v1088
    %v1156 = vpop.f32.mrf.mxu0
    %v1157 = vadd.f32 0.0, %v1156
    %v1158 = vpop.f32.mrf.mxu0
    %1159 = vdwg.mxu0
    %v1161 = vsel %vm294, %v1086, 0
    %1163 = vmatprep.subr.mxu0 0.0
    %1164 = vmatpush1.msra.mxu0 0.0
    %1165 = vmatprep.subr.mxu0 0.0
    %1166 = vmatpush1.msra.mxu0 0.0
    %1167 = vmatprep.subr.mxu0 0.0
    %1168 = vmatpush1.msra.mxu0 0.0
    %1169 = vmatprep.subr.mxu0 0.0
    %1170 = vmatpush1.msra.mxu0 0.0
    %1171 = vmatprep.subr.mxu0 0.0
    %1172 = vmatpush1.msra.mxu0 0.0
    %1173 = vmatprep.subr.mxu0 0.0
    %1174 = vmatpush1.msra.mxu0 0.0
    %1175 = vmatprep.subr.mxu0 0.0
    %1176 = vmatpush1.msra.mxu0 0.0
    %1177 = vmatprep.subr.mxu0 0.0
    %1178 = vmatpush1.msra.mxu0 0.0
    %1179 = vmatprep.subr.mxu0 0.0
    %1180 = vmatpush1.msra.mxu0 0.0
    %1181 = vmatprep.subr.mxu0 0.0
    %1182 = vmatpush1.msra.mxu0 0.0
    %1183 = vmatprep.subr.mxu0 0.0
    %1184 = vmatpush1.msra.mxu0 0.0
    %1185 = vmatprep.subr.mxu0 0.0
    %1186 = vmatpush1.msra.mxu0 0.0
    %1187 = vmatprep.subr.mxu0 0.0
    %1188 = vmatpush1.msra.mxu0 0.0
    %1189 = vmatprep.subr.mxu0 0.0
    %1190 = vmatpush1.msra.mxu0 0.0
    %1191 = vmatprep.subr.mxu0 0.0
    %1192 = vmatpush1.msra.mxu0 0.0
    %1193 = vmatprep.subr.mxu0 0.0
    %1194 = vmatpush1.msra.mxu0 %v914
    %1195 = vmatprep.subr.mxu0 0.0
    %1196 = vmatpush2.msra.mxu0 0.0
    %1197 = vmatprep.subr.mxu0 0.0
    %1198 = vmatpush2.msra.mxu0 0.0
    %1199 = vmatprep.subr.mxu0 0.0
    %1200 = vmatpush2.msra.mxu0 0.0
    %1201 = vmatprep.subr.mxu0 0.0
    %1202 = vmatpush2.msra.mxu0 0.0
    %1203 = vmatprep.subr.mxu0 0.0
    %1204 = vmatpush2.msra.mxu0 0.0
    %1205 = vmatprep.subr.mxu0 0.0
    %1206 = vmatpush2.msra.mxu0 0.0
    %1207 = vmatprep.subr.mxu0 0.0
    %1208 = vmatpush2.msra.mxu0 0.0
    %1209 = vmatprep.subr.mxu0 0.0
    %1210 = vmatpush2.msra.mxu0 0.0
    %1211 = vmatprep.subr.mxu0 0.0
    %1212 = vmatpush2.msra.mxu0 0.0
    %1213 = vmatprep.subr.mxu0 0.0
    %1214 = vmatpush2.msra.mxu0 0.0
    %1215 = vmatprep.subr.mxu0 0.0
    %1216 = vmatpush2.msra.mxu0 0.0
    %1217 = vmatprep.subr.mxu0 0.0
    %1218 = vmatpush2.msra.mxu0 0.0
    %1219 = vmatprep.subr.mxu0 0.0
    %1220 = vmatpush2.msra.mxu0 0.0
    %1221 = vmatprep.subr.mxu0 0.0
    %1222 = vmatpush2.msra.mxu0 0.0
    %1223 = vmatprep.subr.mxu0 0.0
    %1224 = vmatpush2.msra.mxu0 0.0
    %1225 = vmatprep.subr.mxu0 0.0
    %1226 = vmatpush2.msra.mxu0 0.0
    %1227 = vmatprep.mubr.f32.mxu0 0.0
    %1228 = vmatmul.mubr.f32.gmra.mxu0 %v1161
    %v1229 = vpop.f32.mrf.mxu0
    %v1230 = vadd.f32 0.0, %v1229
    %v1231 = vpop.f32.mrf.mxu0
    %1232 = vdwg.mxu0
    %v1233 = vlaneseq
    %v1234 = vshrl.u32 %v1233, 7
    %v1235 = vsub.s32 1, %v1234
    %v1236 = vrot.slane %v829, %v1235
    %v1238 = vsel %vm64, %v1157, 0
    %v1241 = vsel %vm64, %v1230, 0
    %1243 = vmatprep.subr.mxu0 0.0
    %1244 = vmatpush1.msra.mxu0 0.0
    %1245 = vmatprep.subr.mxu0 0.0
    %1246 = vmatpush1.msra.mxu0 0.0
    %1247 = vmatprep.subr.mxu0 0.0
    %1248 = vmatpush1.msra.mxu0 0.0
    %1249 = vmatprep.subr.mxu0 0.0
    %1250 = vmatpush1.msra.mxu0 0.0
    %1251 = vmatprep.subr.mxu0 0.0
    %1252 = vmatpush1.msra.mxu0 0.0
    %1253 = vmatprep.subr.mxu0 0.0
    %1254 = vmatpush1.msra.mxu0 0.0
    %1255 = vmatprep.subr.mxu0 0.0
    %1256 = vmatpush1.msra.mxu0 0.0
    %1257 = vmatprep.subr.mxu0 0.0
    %1258 = vmatpush1.msra.mxu0 0.0
    %1259 = vmatprep.subr.mxu0 0.0
    %1260 = vmatpush1.msra.mxu0 0.0
    %1261 = vmatprep.subr.mxu0 0.0
    %1262 = vmatpush1.msra.mxu0 0.0
    %1263 = vmatprep.subr.mxu0 0.0
    %1264 = vmatpush1.msra.mxu0 0.0
    %1265 = vmatprep.subr.mxu0 0.0
    %1266 = vmatpush1.msra.mxu0 0.0
    %1267 = vmatprep.subr.mxu0 0.0
    %1268 = vmatpush1.msra.mxu0 %v813
    %1269 = vmatprep.subr.mxu0 0.0
    %1270 = vmatpush1.msra.mxu0 %v812
    %1271 = vmatprep.subr.mxu0 0.0
    %1272 = vmatpush1.msra.mxu0 %v811
    %1273 = vmatprep.subr.mxu0 0.0
    %1274 = vmatpush1.msra.mxu0 %v810
    %1275 = vmatprep.subr.mxu0 0.0
    %1276 = vmatpush2.msra.mxu0 0.0
    %1277 = vmatprep.subr.mxu0 0.0
    %1278 = vmatpush2.msra.mxu0 0.0
    %1279 = vmatprep.subr.mxu0 0.0
    %1280 = vmatpush2.msra.mxu0 0.0
    %1281 = vmatprep.subr.mxu0 0.0
    %1282 = vmatpush2.msra.mxu0 0.0
    %1283 = vmatprep.subr.mxu0 0.0
    %1284 = vmatpush2.msra.mxu0 0.0
    %1285 = vmatprep.subr.mxu0 0.0
    %1286 = vmatpush2.msra.mxu0 0.0
    %1287 = vmatprep.subr.mxu0 0.0
    %1288 = vmatpush2.msra.mxu0 0.0
    %1289 = vmatprep.subr.mxu0 0.0
    %1290 = vmatpush2.msra.mxu0 0.0
    %1291 = vmatprep.subr.mxu0 0.0
    %1292 = vmatpush2.msra.mxu0 0.0
    %1293 = vmatprep.subr.mxu0 0.0
    %1294 = vmatpush2.msra.mxu0 0.0
    %1295 = vmatprep.subr.mxu0 0.0
    %1296 = vmatpush2.msra.mxu0 0.0
    %1297 = vmatprep.subr.mxu0 0.0
    %1298 = vmatpush2.msra.mxu0 0.0
    %1299 = vmatprep.subr.mxu0 0.0
    %1300 = vmatpush2.msra.mxu0 0.0
    %1301 = vmatprep.subr.mxu0 0.0
    %1302 = vmatpush2.msra.mxu0 0.0
    %1303 = vmatprep.subr.mxu0 0.0
    %1304 = vmatpush2.msra.mxu0 0.0
    %1305 = vmatprep.subr.mxu0 0.0
    %1306 = vmatpush2.msra.mxu0 0.0
    %1307 = vmatprep.mubr.f32.mxu0 0.0
    %1308 = vmatmul.mubr.f32.gmra.mxu0 %v1238
    %v1309 = vpop.f32.mrf.mxu0
    %v1310 = vadd.f32 %v1236, %v1309
    %v1311 = vpop.f32.mrf.mxu0
    %1312 = vmatprep.mubr.f32.mxu0 0.0
    %1313 = vmatmul.mubr.f32.gmra.mxu0 %v1241
    %v1314 = vpop.f32.mrf.mxu0
    %v1315 = vadd.f32 %v1236, %v1314
    %v1316 = vpop.f32.mrf.mxu0
    %1317 = vdwg.mxu0
    %v1318 = vadd.f32 %v802, %v1310
    %v1319 = vadd.f32 %v803, %v1315
    %v1320 = vsel %vm64, %v1318, 0.0
    %1321 = vadd.xlane.f32.xlu0 %v1320
    %v1322 = vpop.xlane.xlu0 %1321
    %v1323 = vsel %vm64, %v1319, 0.0
    %1324 = vadd.xlane.f32.xlu0 %v1323
    %v1325 = vpop.xlane.xlu0 %1324
    %v1326 = vmul.f32 %v1322, %v556
    %v1327 = vmul.f32 %v1325, %v556
    %v1328 = vsub.f32 %v1318, %v1326
    %v1329 = vsub.f32 %v1319, %v1327
    %v1330 = vmul.f32 %v1328, %v1328
    %v1331 = vmul.f32 %v1329, %v1329
    %v1332 = vsel %vm64, %v1330, 0.0
    %1333 = vadd.xlane.f32.xlu0 %v1332
    %v1334 = vpop.xlane.xlu0 %1333
    %v1335 = vsel %vm64, %v1331, 0.0
    %1336 = vadd.xlane.f32.xlu0 %v1335
    %v1337 = vpop.xlane.xlu0 %1336
    %v1338 = vmul.f32 %v1334, %v556
    %v1339 = vmul.f32 %v1337, %v556
    %v1340 = vadd.f32 %v1338, 1e-05
    %v1341 = vadd.f32 %v1339, 1e-05
    %v1342 = vrsqrt.pop %v1340
    %v1343 = vrsqrt.pop %v1341
    %v1344 = vmul.f32 %v1328, %v1342
    %v1345 = vmul.f32 %v1329, %v1343
    %v1346 = vlaneseq
    %v1347 = vshrl.u32 %v1346, 7
    %v1348 = vsub.s32 3, %v1347
    %v1349 = vrot.slane %v829, %v1348
    %v1350 = vmul.f32 %v1344, %v1349
    %v1351 = vmul.f32 %v1345, %v1349
    %v1352 = vlaneseq
    %v1353 = vshrl.u32 %v1352, 7
    %v1354 = vsub.s32 4, %v1353
    %v1355 = vrot.slane %v829, %v1354
    %v1356 = vadd.f32 %v1350, %v1355
    %v1357 = vadd.f32 %v1351, %v1355
    %v1359 = vlaneseq
    %v1360 = vshrl.u32 %v1359, 7
    %v1361 = vsub.s32 0, %v1360
    %v1362 = vrot.slane %v831, %v1361
    %v1365 = vsel %vm64, %v1356, 0
    %v1368 = vsel %vm64, %v1357, 0
    %1370 = vmatprep.subr.mxu0 0.0
    %1371 = vmatpush1.msra.mxu0 0.0
    %1372 = vmatprep.subr.mxu0 0.0
    %1373 = vmatpush1.msra.mxu0 0.0
    %1374 = vmatprep.subr.mxu0 0.0
    %1375 = vmatpush1.msra.mxu0 0.0
    %1376 = vmatprep.subr.mxu0 0.0
    %1377 = vmatpush1.msra.mxu0 0.0
    %1378 = vmatprep.subr.mxu0 0.0
    %1379 = vmatpush1.msra.mxu0 0.0
    %1380 = vmatprep.subr.mxu0 0.0
    %1381 = vmatpush1.msra.mxu0 0.0
    %1382 = vmatprep.subr.mxu0 0.0
    %1383 = vmatpush1.msra.mxu0 0.0
    %1384 = vmatprep.subr.mxu0 0.0
    %1385 = vmatpush1.msra.mxu0 0.0
    %1386 = vmatprep.subr.mxu0 0.0
    %1387 = vmatpush1.msra.mxu0 0.0
    %1388 = vmatprep.subr.mxu0 0.0
    %1389 = vmatpush1.msra.mxu0 0.0
    %1390 = vmatprep.subr.mxu0 0.0
    %1391 = vmatpush1.msra.mxu0 0.0
    %1392 = vmatprep.subr.mxu0 0.0
    %1393 = vmatpush1.msra.mxu0 0.0
    %1394 = vmatprep.subr.mxu0 0.0
    %1395 = vmatpush1.msra.mxu0 %v818
    %1396 = vmatprep.subr.mxu0 0.0
    %1397 = vmatpush1.msra.mxu0 %v817
    %1398 = vmatprep.subr.mxu0 0.0
    %1399 = vmatpush1.msra.mxu0 %v816
    %1400 = vmatprep.subr.mxu0 0.0
    %1401 = vmatpush1.msra.mxu0 %v815
    %1402 = vmatprep.subr.mxu0 0.0
    %1403 = vmatpush2.msra.mxu0 0.0
    %1404 = vmatprep.subr.mxu0 0.0
    %1405 = vmatpush2.msra.mxu0 0.0
    %1406 = vmatprep.subr.mxu0 0.0
    %1407 = vmatpush2.msra.mxu0 0.0
    %1408 = vmatprep.subr.mxu0 0.0
    %1409 = vmatpush2.msra.mxu0 0.0
    %1410 = vmatprep.subr.mxu0 0.0
    %1411 = vmatpush2.msra.mxu0 0.0
    %1412 = vmatprep.subr.mxu0 0.0
    %1413 = vmatpush2.msra.mxu0 0.0
    %1414 = vmatprep.subr.mxu0 0.0
    %1415 = vmatpush2.msra.mxu0 0.0
    %1416 = vmatprep.subr.mxu0 0.0
    %1417 = vmatpush2.msra.mxu0 0.0
    %1418 = vmatprep.subr.mxu0 0.0
    %1419 = vmatpush2.msra.mxu0 0.0
    %1420 = vmatprep.subr.mxu0 0.0
    %1421 = vmatpush2.msra.mxu0 0.0
    %1422 = vmatprep.subr.mxu0 0.0
    %1423 = vmatpush2.msra.mxu0 0.0
    %1424 = vmatprep.subr.mxu0 0.0
    %1425 = vmatpush2.msra.mxu0 0.0
    %1426 = vmatprep.subr.mxu0 0.0
    %1427 = vmatpush2.msra.mxu0 0.0
    %1428 = vmatprep.subr.mxu0 0.0
    %1429 = vmatpush2.msra.mxu0 0.0
    %1430 = vmatprep.subr.mxu0 0.0
    %1431 = vmatpush2.msra.mxu0 0.0
    %1432 = vmatprep.subr.mxu0 0.0
    %1433 = vmatpush2.msra.mxu0 0.0
    %1434 = vmatprep.mubr.f32.mxu0 0.0
    %1435 = vmatmul.mubr.f32.gmra.mxu0 %v1365
    %v1436 = vpop.f32.mrf.mxu0
    %v1437 = vadd.f32 %v1362, %v1436
    %v1438 = vpop.f32.mrf.mxu0
    %1439 = vmatprep.mubr.f32.mxu0 0.0
    %1440 = vmatmul.mubr.f32.gmra.mxu0 %v1368
    %v1441 = vpop.f32.mrf.mxu0
    %v1442 = vadd.f32 %v1362, %v1441
    %v1443 = vpop.f32.mrf.mxu0
    %1444 = vdwg.mxu0
    %v1445 = vmax.f32 %v1437, 0.0
    %v1446 = vmax.f32 %v1442, 0.0
    %v1447 = vlaneseq
    %v1448 = vshrl.u32 %v1447, 7
    %v1449 = vsub.s32 2, %v1448
    %v1450 = vrot.slane %v829, %v1449
    %v1452 = vsel %vm682, %v1445, 0
    %v1455 = vsel %vm682, %v1446, 0
    %1457 = vmatprep.subr.mxu0 0.0
    %1458 = vmatpush1.msra.mxu0 0.0
    %1459 = vmatprep.subr.mxu0 0.0
    %1460 = vmatpush1.msra.mxu0 0.0
    %1461 = vmatprep.subr.mxu0 0.0
    %1462 = vmatpush1.msra.mxu0 0.0
    %1463 = vmatprep.subr.mxu0 0.0
    %1464 = vmatpush1.msra.mxu0 0.0
    %1465 = vmatprep.subr.mxu0 0.0
    %1466 = vmatpush1.msra.mxu0 0.0
    %1467 = vmatprep.subr.mxu0 0.0
    %1468 = vmatpush1.msra.mxu0 0.0
    %1469 = vmatprep.subr.mxu0 0.0
    %1470 = vmatpush1.msra.mxu0 0.0
    %1471 = vmatprep.subr.mxu0 0.0
    %1472 = vmatpush1.msra.mxu0 0.0
    %1473 = vmatprep.subr.mxu0 0.0
    %1474 = vmatpush1.msra.mxu0 %v827
    %1475 = vmatprep.subr.mxu0 0.0
    %1476 = vmatpush1.msra.mxu0 %v826
    %1477 = vmatprep.subr.mxu0 0.0
    %1478 = vmatpush1.msra.mxu0 %v825
    %1479 = vmatprep.subr.mxu0 0.0
    %1480 = vmatpush1.msra.mxu0 %v824
    %1481 = vmatprep.subr.mxu0 0.0
    %1482 = vmatpush1.msra.mxu0 %v823
    %1483 = vmatprep.subr.mxu0 0.0
    %1484 = vmatpush1.msra.mxu0 %v822
    %1485 = vmatprep.subr.mxu0 0.0
    %1486 = vmatpush1.msra.mxu0 %v821
    %1487 = vmatprep.subr.mxu0 0.0
    %1488 = vmatpush1.msra.mxu0 %v820
    %1489 = vmatprep.subr.mxu0 0.0
    %1490 = vmatpush2.msra.mxu0 0.0
    %1491 = vmatprep.subr.mxu0 0.0
    %1492 = vmatpush2.msra.mxu0 0.0
    %1493 = vmatprep.subr.mxu0 0.0
    %1494 = vmatpush2.msra.mxu0 0.0
    %1495 = vmatprep.subr.mxu0 0.0
    %1496 = vmatpush2.msra.mxu0 0.0
    %1497 = vmatprep.subr.mxu0 0.0
    %1498 = vmatpush2.msra.mxu0 0.0
    %1499 = vmatprep.subr.mxu0 0.0
    %1500 = vmatpush2.msra.mxu0 0.0
    %1501 = vmatprep.subr.mxu0 0.0
    %1502 = vmatpush2.msra.mxu0 0.0
    %1503 = vmatprep.subr.mxu0 0.0
    %1504 = vmatpush2.msra.mxu0 0.0
    %1505 = vmatprep.subr.mxu0 0.0
    %1506 = vmatpush2.msra.mxu0 0.0
    %1507 = vmatprep.subr.mxu0 0.0
    %1508 = vmatpush2.msra.mxu0 0.0
    %1509 = vmatprep.subr.mxu0 0.0
    %1510 = vmatpush2.msra.mxu0 0.0
    %1511 = vmatprep.subr.mxu0 0.0
    %1512 = vmatpush2.msra.mxu0 0.0
    %1513 = vmatprep.subr.mxu0 0.0
    %1514 = vmatpush2.msra.mxu0 0.0
    %1515 = vmatprep.subr.mxu0 0.0
    %1516 = vmatpush2.msra.mxu0 0.0
    %1517 = vmatprep.subr.mxu0 0.0
    %1518 = vmatpush2.msra.mxu0 0.0
    %1519 = vmatprep.subr.mxu0 0.0
    %1520 = vmatpush2.msra.mxu0 0.0
    %1521 = vmatprep.mubr.f32.mxu0 0.0
    %1522 = vmatmul.mubr.f32.gmra.mxu0 %v1452
    %v1523 = vpop.f32.mrf.mxu0
    %v1524 = vadd.f32 %v1450, %v1523
    %v1525 = vpop.f32.mrf.mxu0
    %1526 = vmatprep.mubr.f32.mxu0 0.0
    %1527 = vmatmul.mubr.f32.gmra.mxu0 %v1455
    %v1528 = vpop.f32.mrf.mxu0
    %v1529 = vadd.f32 %v1450, %v1528
    %v1530 = vpop.f32.mrf.mxu0
    %1531 = vdwg.mxu0
    %v1532 = vadd.f32 %v1356, %v1524
    %v1533 = vadd.f32 %v1357, %v1529
    %v1534 = vsel %vm64, %v1532, 0.0
    %1535 = vadd.xlane.f32.xlu0 %v1534
    %v1536 = vpop.xlane.xlu0 %1535
    %v1537 = vsel %vm64, %v1533, 0.0
    %1538 = vadd.xlane.f32.xlu0 %v1537
    %v1539 = vpop.xlane.xlu0 %1538
    %v1540 = vmul.f32 %v1536, %v556
    %v1541 = vmul.f32 %v1539, %v556
    %v1542 = vsub.f32 %v1532, %v1540
    %v1543 = vsub.f32 %v1533, %v1541
    %v1544 = vmul.f32 %v1542, %v1542
    %v1545 = vmul.f32 %v1543, %v1543
    %v1546 = vsel %vm64, %v1544, 0.0
    %1547 = vadd.xlane.f32.xlu0 %v1546
    %v1548 = vpop.xlane.xlu0 %1547
    %v1549 = vsel %vm64, %v1545, 0.0
    %1550 = vadd.xlane.f32.xlu0 %v1549
    %v1551 = vpop.xlane.xlu0 %1550
    %v1552 = vmul.f32 %v1548, %v556
    %v1553 = vmul.f32 %v1551, %v556
    %v1554 = vadd.f32 %v1552, 1e-05
    %v1555 = vadd.f32 %v1553, 1e-05
    %v1556 = vrsqrt.pop %v1554
    %v1557 = vrsqrt.pop %v1555
    %v1558 = vmul.f32 %v1542, %v1556
    %v1559 = vmul.f32 %v1543, %v1557
    %v1560 = vlaneseq
    %v1561 = vshrl.u32 %v1560, 7
    %v1562 = vsub.s32 5, %v1561
    %v1563 = vrot.slane %v829, %v1562
    %v1564 = vmul.f32 %v1558, %v1563
    %v1565 = vmul.f32 %v1559, %v1563
    %v1566 = vlaneseq
    %v1567 = vshrl.u32 %v1566, 7
    %v1568 = vsub.s32 6, %v1567
    %v1569 = vrot.slane %v829, %v1568
    %v1570 = vadd.f32 %v1564, %v1569
    %v1571 = vadd.f32 %v1565, %v1569
    %1572 = vst.msk [vmem:[#allocation2] sm:$0xff] %vm64, %v1570
    %1573 = vst.msk [vmem:[#allocation2 + $0x8] sm:$0xff] %vm64, %v1571
    // Predicated region
    $region34: #{encoder_forward.1} parent=1 // pred_check
      _
    $region35: #{encoder_forward.1} parent=1 // pred_check_branch
      %1575 = sbr.rel (0) target = $region37
    $region36: #{encoder_forward.1} parent=1 // pred_region
      %s1577 = ssub.s32 256, 256
      %1578 = vsyncadd [#allocation3], %s1577
      %s1579 = sshll.u32 [#allocation2], 4
      %s1580 = int_to_ptr.vmem [resolvable:$true] %s1579
      %1585 = dma.vmem_to_hbm [thread:$0]  %s1580, 256, %s8, [#allocation3], 128, 128, 8
    $region37: #{encoder_forward.1} parent=1 // pred_fallthru
      _
    // Predicated region
    $region38: #{encoder_forward.1} parent=1 // pred_check
      _
    $region39: #{encoder_forward.1} parent=1 // pred_check_branch
      %1587 = sbr.rel (0) target = $region41
    $region40: #{encoder_forward.1} parent=1 // pred_region
      %1588 = dma.done [#allocation3], 256
    $region41: #{encoder_forward.1} parent=1 // pred_fallthru
      _
    %1589 = vsyncpa [#allocation3], 1

</llo_original>
